<compile_context>
chip_gen: v7x
topology: tpu7x:2x2x1
jax: 0.10.0
libtpu: 0.0.40
codegen_flags: <defaults>
</compile_context>

<pallas_src>
import functools

import jax
import jax.numpy as jnp
from jax.experimental import pallas as pl
from jax.experimental.pallas import tpu as pltpu


# ----------------------------- Pallas kernels ------------------------------

def _mm_stats_kernel(a_ref, b_ref, y_ref, s_ref, q_ref, acc_ref):
    """Tiled GEMM (bf16 in, f32 acc) that also accumulates per-column sum and
    sum-of-squares of the result (for training-mode BatchNorm).
    grid = (j: N tiles, i: M tiles, k: K tiles); stats blocks are indexed by j
    only, so they stay VMEM-resident and accumulate across i and k."""
    i = pl.program_id(1)
    k = pl.program_id(2)

    @pl.when(k == 0)
    def _():
        acc_ref[...] = jnp.zeros_like(acc_ref)

    @pl.when(jnp.logical_and(i == 0, k == 0))
    def _():
        s_ref[...] = jnp.zeros_like(s_ref)
        q_ref[...] = jnp.zeros_like(q_ref)

    acc_ref[...] += jnp.dot(a_ref[...], b_ref[...],
                            preferred_element_type=jnp.float32)

    @pl.when(k == pl.num_programs(2) - 1)
    def _():
        y = acc_ref[...]
        y_ref[...] = y.astype(y_ref.dtype)
        s_ref[...] += jnp.sum(y, axis=0, keepdims=True)
        q_ref[...] += jnp.sum(y * y, axis=0, keepdims=True)


def _mm_bias_kernel(a_ref, b_ref, bias_ref, o_ref, acc_ref):
    """Tiled GEMM with the bias add fused into the final-k epilogue."""
    @pl.when(pl.program_id(2) == 0)
    def _():
        acc_ref[...] = jnp.zeros_like(acc_ref)

    acc_ref[...] += jnp.dot(a_ref[...], b_ref[...],
                            preferred_element_type=jnp.float32)

    @pl.when(pl.program_id(2) == pl.num_programs(2) - 1)
    def _():
        o_ref[...] = (acc_ref[...] + bias_ref[...]).astype(o_ref.dtype)


def _bn_act_kernel(x_ref, scale_ref, shift_ref, o_ref, *, relu):
    y = x_ref[...].astype(jnp.float32) * scale_ref[...] + shift_ref[...]
    if relu:
        y = jnp.maximum(y, 0.0)
    o_ref[...] = y.astype(o_ref.dtype)


def _bn_act_res_kernel(x_ref, scale_ref, shift_ref, r_ref, o_ref, *, relu):
    y = x_ref[...].astype(jnp.float32) * scale_ref[...] + shift_ref[...]
    y = y + r_ref[...].astype(jnp.float32)
    if relu:
        y = jnp.maximum(y, 0.0)
    o_ref[...] = y.astype(o_ref.dtype)


def _max9_kernel(*refs):
    *in_refs, o_ref = refs
    acc = in_refs[0][...]
    for r in in_refs[1:]:
        acc = jnp.maximum(acc, r[...])
    o_ref[...] = acc


def _avgpool_kernel(x_ref, o_ref):
    o_ref[...] = jnp.mean(x_ref[...].astype(jnp.float32), axis=1,
                          keepdims=True)


def _softmax_kernel(x_ref, o_ref):
    x = x_ref[...].astype(jnp.float32)
    m = jnp.max(x, axis=1, keepdims=True)
    e = jnp.exp(x - m)
    o_ref[...] = e / jnp.sum(e, axis=1, keepdims=True)


# ----------------------------- tiling helpers -------------------------------

def _round_up(x, m):
    return (x + m - 1) // m * m


def _pick_tm(m):
    return _round_up(m, 8) if m < 256 else 256


def _pick_tn(n):
    npad = _round_up(n, 128)
    return npad if npad < 256 else 256


def _pick_tk(k):
    kpad = _round_up(k, 128)
    for t in (512, 384, 256, 128):
        if kpad % t == 0:
            return t
    return 128


def _row_tile(m, cap=512):
    return m if m < cap else cap


def _col_tile(c, cap=512):
    if c <= cap:
        return c
    return cap if c % cap == 0 else c


# ----------------------------- Pallas wrappers ------------------------------

def pallas_conv_gemm(a, b):
    """a: (M, K) bf16 patches, b: (K, N) bf16 weights.
    Returns (y, colsum, colsumsq): y (M, N) bf16 and f32 per-column stats."""
    m, k = a.shape
    k2, n = b.shape
    assert k == k2
    tm, tn, tk = _pick_tm(m), _pick_tn(n), _pick_tk(k)
    mp, np_, kp = _round_up(m, tm), _round_up(n, tn), _round_up(k, tk)
    a_p = jnp.pad(a, ((0, mp - m), (0, kp - k)))     # zero rows: stats-safe
    b_p = jnp.pad(b, ((0, kp - k), (0, np_ - n)))
    grid = (np_ // tn, mp // tm, kp // tk)           # (j, i, k)
    y, s, q = pl.pallas_call(
        _mm_stats_kernel,
        out_shape=(jax.ShapeDtypeStruct((mp, np_), jnp.bfloat16),
                   jax.ShapeDtypeStruct((1, np_), jnp.float32),
                   jax.ShapeDtypeStruct((1, np_), jnp.float32)),
        grid_spec=pltpu.PrefetchScalarGridSpec(
            num_scalar_prefetch=0,
            grid=grid,
            in_specs=[pl.BlockSpec((tm, tk), lambda j, i, kk: (i, kk)),
                      pl.BlockSpec((tk, tn), lambda j, i, kk: (kk, j))],
            out_specs=(pl.BlockSpec((tm, tn), lambda j, i, kk: (i, j)),
                       pl.BlockSpec((1, tn), lambda j, i, kk: (0, j)),
                       pl.BlockSpec((1, tn), lambda j, i, kk: (0, j))),
            scratch_shapes=[pltpu.VMEM((tm, tn), jnp.float32)]),
        compiler_params=pltpu.CompilerParams(
            dimension_semantics=("parallel", "arbitrary", "arbitrary")),
    )(a_p, b_p)
    return y[:m, :n], s[:, :n], q[:, :n]


def pallas_bn_act(y2d, gamma, beta, colsum, colsumsq, relu, residual=None,
                  eps=1e-5):
    """Training-mode BN (batch stats) + optional residual add + optional ReLU
    as one tiled elementwise pass over (M, C).  Scale/shift math is f32."""
    m, c = y2d.shape
    mean = colsum / m
    var = jnp.maximum(colsumsq / m - mean * mean, 0.0)   # biased, like torch
    scale = gamma.reshape(1, c) * jax.lax.rsqrt(var + eps)
    shift = beta.reshape(1, c) - mean * scale

    tm = _row_tile(m)
    tc = _col_tile(c)
    grid = (pl.cdiv(m, tm), c // tc)
    mat_spec = pl.BlockSpec((tm, tc), lambda i, j: (i, j))
    vec_spec = pl.BlockSpec((1, tc), lambda i, j: (0, j))
    if residual is None:
        kernel = functools.partial(_bn_act_kernel, relu=relu)
        in_specs = [mat_spec, vec_spec, vec_spec]
        args = (y2d, scale, shift)
    else:
        kernel = functools.partial(_bn_act_res_kernel, relu=relu)
        in_specs = [mat_spec, vec_spec, vec_spec, mat_spec]
        args = (y2d, scale, shift, residual)
    return pl.pallas_call(
        kernel,
        out_shape=jax.ShapeDtypeStruct((m, c), jnp.bfloat16),
        grid_spec=pltpu.PrefetchScalarGridSpec(
            num_scalar_prefetch=0, grid=grid,
            in_specs=in_specs, out_specs=mat_spec),
        compiler_params=pltpu.CompilerParams(
            dimension_semantics=("parallel", "parallel")),
    )(*args)


def _im2col(x, kh, kw, stride, pad):
    """x: (N, H, W, C) -> (N*Ho*Wo, kh*kw*C) patches ordered (ky, kx, c)."""
    n, h, w, c = x.shape
    ho = (h + 2 * pad - kh) // stride + 1
    wo = (w + 2 * pad - kw) // stride + 1
    if kh == 1 and kw == 1 and pad == 0:
        xs = x[:, ::stride, ::stride, :]
        return xs.reshape(n * ho * wo, c), (n, ho, wo)
    # TODO(synk): gather the kh*kw shifted windows inside the GEMM kernel
    # (fold taps into the K grid axis) instead of materializing them in HBM.
    xp = jnp.pad(x, ((0, 0), (pad, pad), (pad, pad), (0, 0)))
    cols = []
    for ky in range(kh):
        for kx in range(kw):
            cols.append(xp[:, ky:ky + stride * (ho - 1) + 1:stride,
                            kx:kx + stride * (wo - 1) + 1:stride, :])
    patches = jnp.concatenate(cols, axis=-1)
    return patches.reshape(n * ho * wo, kh * kw * c), (n, ho, wo)


def conv_bn_act(x, w, bn, stride, pad, relu, residual=None):
    """Conv2d(bias=False) + BatchNorm2d (training statistics)
    [+ residual add] [+ ReLU].  x: (N,H,W,Cin) bf16, w: HWIO bf16."""
    kh, kw, cin, cout = w.shape
    patches, (n, ho, wo) = _im2col(x, kh, kw, stride, pad)
    y, s, q = pallas_conv_gemm(patches, w.reshape(kh * kw * cin, cout))
    res2d = None if residual is None else residual.reshape(-1, cout)
    out = pallas_bn_act(y, bn["gamma"], bn["beta"], s, q,
                        relu=relu, residual=res2d)
    return out.reshape(n, ho, wo, cout)


def pallas_maxpool_3x3_s2_p1(x):
    n, h, w, c = x.shape
    ho = (h + 2 - 3) // 2 + 1
    wo = (w + 2 - 3) // 2 + 1
    xp = jnp.pad(x, ((0, 0), (1, 1), (1, 1), (0, 0)),
                 constant_values=-jnp.inf)
    views = []
    for ky in range(3):
        for kx in range(3):
            v = xp[:, ky:ky + 2 * (ho - 1) + 1:2,
                      kx:kx + 2 * (wo - 1) + 1:2, :]
            views.append(v.reshape(n * ho * wo, c))
    m = n * ho * wo
    tm = _row_tile(m)
    tile_spec = pl.BlockSpec((tm, c), lambda i: (i, 0))
    out = pl.pallas_call(
        _max9_kernel,
        out_shape=jax.ShapeDtypeStruct((m, c), x.dtype),
        grid_spec=pltpu.PrefetchScalarGridSpec(
            num_scalar_prefetch=0, grid=(pl.cdiv(m, tm),),
            in_specs=[tile_spec] * 9, out_specs=tile_spec),
        compiler_params=pltpu.CompilerParams(
            dimension_semantics=("parallel",)),
    )(*views)
    return out.reshape(n, ho, wo, c)


def pallas_avgpool(x):
    """AdaptiveAvgPool2d((1,1)) + Flatten: (N, H, W, C) -> (N, C) f32."""
    n, h, w, c = x.shape
    x3 = x.reshape(n, h * w, c)
    out = pl.pallas_call(
        _avgpool_kernel,
        out_shape=jax.ShapeDtypeStruct((n, 1, c), jnp.float32),
        grid_spec=pltpu.PrefetchScalarGridSpec(
            num_scalar_prefetch=0, grid=(n,),
            in_specs=[pl.BlockSpec((1, h * w, c), lambda i: (i, 0, 0))],
            out_specs=pl.BlockSpec((1, 1, c), lambda i: (i, 0, 0))),
        compiler_params=pltpu.CompilerParams(
            dimension_semantics=("parallel",)),
    )(x3)
    return out.reshape(n, c)


def pallas_linear(x, w, b):
    """x: (N, in) bf16, w: (in, out) bf16, b: (out,) f32 -> (N, out) f32.
    Bias add fused into the GEMM epilogue."""
    m, k = x.shape
    k2, n = w.shape
    assert k == k2
    tm, tn, tk = _pick_tm(m), _pick_tn(n), _pick_tk(k)
    mp, np_, kp = _round_up(m, tm), _round_up(n, tn), _round_up(k, tk)
    x_p = jnp.pad(x, ((0, mp - m), (0, kp - k)))
    w_p = jnp.pad(w, ((0, kp - k), (0, np_ - n)))
    b_p = jnp.pad(b.reshape(1, n), ((0, 0), (0, np_ - n)))
    out = pl.pallas_call(
        _mm_bias_kernel,
        out_shape=jax.ShapeDtypeStruct((mp, np_), jnp.float32),
        grid_spec=pltpu.PrefetchScalarGridSpec(
            num_scalar_prefetch=0,
            grid=(mp // tm, np_ // tn, kp // tk),
            in_specs=[pl.BlockSpec((tm, tk), lambda i, j, kk: (i, kk)),
                      pl.BlockSpec((tk, tn), lambda i, j, kk: (kk, j)),
                      pl.BlockSpec((1, tn), lambda i, j, kk: (0, j))],
            out_specs=pl.BlockSpec((tm, tn), lambda i, j, kk: (i, j)),
            scratch_shapes=[pltpu.VMEM((tm, tn), jnp.float32)]),
        compiler_params=pltpu.CompilerParams(
            dimension_semantics=("parallel", "parallel", "arbitrary")),
    )(x_p, w_p, b_p)
    return out[:m, :n]


def pallas_softmax(x):
    # (N, classes) is tiny (<= a few KB); a single un-gridded call is fine.
    return pl.pallas_call(
        _softmax_kernel,
        out_shape=jax.ShapeDtypeStruct(x.shape, jnp.float32),
    )(x)


# ----------------------------- parameters -----------------------------------

def init_params(key, num_channels=3, classes=10):
    counter = [0]

    def nk():
        counter[0] += 1
        return jax.random.fold_in(key, counter[0])

    def conv_w(kh, kw, cin, cout):
        std = (2.0 / (kh * kw * cin)) ** 0.5
        w = jax.random.normal(nk(), (kh, kw, cin, cout), jnp.float32) * std
        return w.astype(jnp.bfloat16)

    def bn(c):
        return {"gamma": jnp.ones((c,), jnp.float32),
                "beta": jnp.zeros((c,), jnp.float32)}

    params = {"conv0": {"w": conv_w(7, 7, num_channels, 64), "bn": bn(64)}}

    blocks = []
    block_repeats = [3, 4, 6, 3]
    in_features = [64, 256, 512, 1024]
    mid_features = [64, 128, 256, 512]
    scale = 4
    for repeat, in_f, mid_f in zip(block_repeats, in_features, mid_features):
        out_f = scale * mid_f
        for bi in range(repeat):
            cin = in_f if bi == 0 else out_f
            final_stride = 2 if bi == repeat - 1 else 1
            blk = {
                "w1": conv_w(1, 1, cin, mid_f), "bn1": bn(mid_f),
                "w2": conv_w(3, 3, mid_f, mid_f), "bn2": bn(mid_f),
                "w3": conv_w(1, 1, mid_f, out_f), "bn3": bn(out_f),
                "final_stride": final_stride,
            }
            if bi == 0:                       # skip_x(in_f, out_f), stride 1
                blk["skip"] = {"w": conv_w(1, 1, cin, out_f),
                               "bn": bn(out_f), "stride": 1}
            elif bi == repeat - 1:            # skip_x(out_f, out_f), stride 2
                blk["skip"] = {"w": conv_w(1, 1, out_f, out_f),
                               "bn": bn(out_f), "stride": 2}
            else:                             # nn.Identity()
                blk["skip"] = None
            blocks.append(blk)
    params["blocks"] = blocks

    flat = scale * mid_features[-1]           # 2048
    params["fc1_w"] = (jax.random.normal(nk(), (flat, 1000), jnp.float32)
                       * (1.0 / flat) ** 0.5).astype(jnp.bfloat16)
    params["fc1_b"] = jax.random.normal(nk(), (1000,), jnp.float32) * 0.01
    params["fc2_w"] = (jax.random.normal(nk(), (1000, classes), jnp.float32)
                       * (1.0 / 1000) ** 0.5).astype(jnp.bfloat16)
    params["fc2_b"] = jax.random.normal(nk(), (classes,), jnp.float32) * 0.01
    return params


# ----------------------------- forward ---------------------------------------

def forward(params, x_nchw):
    # NCHW -> NHWC, bf16 activations in HBM (all accumulation / BN math in f32)
    x = jnp.transpose(x_nchw, (0, 2, 3, 1)).astype(jnp.bfloat16)

    # conv0 block: 7x7/s2 conv -> BN -> ReLU -> MaxPool 3x3/s2/p1
    p0 = params["conv0"]
    x = conv_bn_act(x, p0["w"], p0["bn"], stride=2, pad=3, relu=True)
    x = pallas_maxpool_3x3_s2_p1(x)

    # bottleneck blocks; residual add + final ReLU fused into conv3's epilogue
    for blk in params["blocks"]:
        if blk["skip"] is None:
            s = x
        else:
            sk = blk["skip"]
            s = conv_bn_act(x, sk["w"], sk["bn"], stride=sk["stride"],
                            pad=0, relu=False)
        y = conv_bn_act(x, blk["w1"], blk["bn1"], stride=1, pad=0, relu=True)
        y = conv_bn_act(y, blk["w2"], blk["bn2"], stride=1, pad=1, relu=True)
        x = conv_bn_act(y, blk["w3"], blk["bn3"], stride=blk["final_stride"],
                        pad=0, relu=True, residual=s)

    # classifier: avgpool -> flatten -> Linear -> Linear -> Softmax
    feats = pallas_avgpool(x)                                   # (N, 2048) f32
    h = pallas_linear(feats.astype(jnp.bfloat16),
                      params["fc1_w"], params["fc1_b"])
    h = pallas_linear(h.astype(jnp.bfloat16),
                      params["fc2_w"], params["fc2_b"])
    return pallas_softmax(h)


# ----------------------------- main -------------------------------------------

if __name__ == "__main__":
    key = jax.random.PRNGKey(0)
    params = init_params(key, num_channels=3, classes=10)
    x = jax.random.normal(jax.random.fold_in(key, 12345),
                          (2, 3, 32, 32), jnp.float32)   # NCHW like PyTorch

    out = forward(params, x)
    out = jax.block_until_ready(out)

    assert out.shape == (2, 10), out.shape
    assert bool(jnp.all(jnp.isfinite(out)))
    assert bool(jnp.allclose(jnp.sum(out, axis=1), 1.0, atol=1e-4))
    print("KERNEL_OK")
</pallas_src>

<mosaic_0001>
module attributes {stable_mosaic.version = 11 : i64} {
  func.func @_mm_stats_kernel(%arg0: i32, %arg1: i32, %arg2: i32, %arg3: memref<256x256xbf16, #tpu.memory_space<vmem>>, %arg4: memref<256x128xbf16, #tpu.memory_space<vmem>>, %arg5: memref<256x128xbf16, #tpu.memory_space<vmem>>, %arg6: memref<1x128xf32, #tpu.memory_space<vmem>>, %arg7: memref<1x128xf32, #tpu.memory_space<vmem>>, %arg8: memref<256x128xf32, #tpu.memory_space<vmem>>) attributes {dimension_semantics = [#tpu.dimension_semantics<parallel>, #tpu.dimension_semantics<arbitrary>, #tpu.dimension_semantics<arbitrary>], iteration_bounds = array<i64: 1, 2, 1>, scalar_prefetch = 0 : i64, scratch_operands = 1 : i64, tpu.core_type = #tpu.core_type<tc>, window_params = [{transform_indices = @transform_0, window_bounds = array<i64: 256, 256>}, {transform_indices = @transform_1, window_bounds = array<i64: 256, 128>}, {transform_indices = @transform_2, window_bounds = array<i64: 256, 128>}, {transform_indices = @transform_3, window_bounds = array<i64: 1, 128>}, {transform_indices = @transform_4, window_bounds = array<i64: 1, 128>}]} {
    %c0_i32 = arith.constant 0 : i32
    %0 = arith.cmpi eq, %arg2, %c0_i32 : i32
    %1 = arith.extui %0 : i1 to i32
    %c0_i32_0 = arith.constant 0 : i32
    %2 = arith.cmpi ne, %1, %c0_i32_0 : i32
    scf.if %2 {
      %cst_13 = arith.constant 0.000000e+00 : f32
      %17 = vector.broadcast %cst_13 : f32 to vector<256x128xf32>
      %c0_14 = arith.constant 0 : index
      %c0_15 = arith.constant 0 : index
      %18 = vector.load %arg8[%c0_14, %c0_15] : memref<256x128xf32, #tpu.memory_space<vmem>>, vector<256x128xf32>
      tpu.vector_store %arg8[%c0_14, %c0_15], %17 {strides = array<i32>} : memref<256x128xf32, #tpu.memory_space<vmem>>, vector<256x128xf32>,
    } else {
    }
    %c0_i32_1 = arith.constant 0 : i32
    %3 = arith.cmpi eq, %arg1, %c0_i32_1 : i32
    %c0_i32_2 = arith.constant 0 : i32
    %4 = arith.cmpi eq, %arg2, %c0_i32_2 : i32
    %5 = arith.andi %3, %4 : i1
    %6 = arith.extui %5 : i1 to i32
    %c0_i32_3 = arith.constant 0 : i32
    %7 = arith.cmpi ne, %6, %c0_i32_3 : i32
    scf.if %7 {
      %cst_13 = arith.constant 0.000000e+00 : f32
      %17 = vector.broadcast %cst_13 : f32 to vector<1x128xf32>
      %c0_14 = arith.constant 0 : index
      %c0_15 = arith.constant 0 : index
      %18 = vector.load %arg6[%c0_14, %c0_15] : memref<1x128xf32, #tpu.memory_space<vmem>>, vector<1x128xf32>
      tpu.vector_store %arg6[%c0_14, %c0_15], %17 {strides = array<i32>} : memref<1x128xf32, #tpu.memory_space<vmem>>, vector<1x128xf32>,
      %cst_16 = arith.constant 0.000000e+00 : f32
      %19 = vector.broadcast %cst_16 : f32 to vector<1x128xf32>
      %c0_17 = arith.constant 0 : index
      %c0_18 = arith.constant 0 : index
      %20 = vector.load %arg7[%c0_17, %c0_18] : memref<1x128xf32, #tpu.memory_space<vmem>>, vector<1x128xf32>
      tpu.vector_store %arg7[%c0_17, %c0_18], %19 {strides = array<i32>} : memref<1x128xf32, #tpu.memory_space<vmem>>, vector<1x128xf32>,
    } else {
    }
    %c0 = arith.constant 0 : index
    %c0_4 = arith.constant 0 : index
    %8 = vector.load %arg8[%c0, %c0_4] : memref<256x128xf32, #tpu.memory_space<vmem>>, vector<256x128xf32>
    %c0_5 = arith.constant 0 : index
    %c0_6 = arith.constant 0 : index
    %9 = vector.load %arg3[%c0_5, %c0_6] : memref<256x256xbf16, #tpu.memory_space<vmem>>, vector<256x256xbf16>
    %c0_7 = arith.constant 0 : index
    %c0_8 = arith.constant 0 : index
    %10 = vector.load %arg4[%c0_7, %c0_8] : memref<256x128xbf16, #tpu.memory_space<vmem>>, vector<256x128xbf16>
    %cst = arith.constant dense<0.000000e+00> : vector<256x128xf32>
    %11 = tpu.matmul %9, %10, %cst {dimension_numbers = #tpu.dot_dimension_numbers<[1], [0], [0], [1], [0, 0, 1, 1], [], []>} : vector<256x256xbf16>, vector<256x128xbf16>, vector<256x128xf32> -> vector<256x128xf32>
    %12 = arith.addf %8, %11 : vector<256x128xf32>
    %c0_9 = arith.constant 0 : index
    %c0_10 = arith.constant 0 : index
    %13 = vector.load %arg8[%c0_9, %c0_10] : memref<256x128xf32, #tpu.memory_space<vmem>>, vector<256x128xf32>
    tpu.vector_store %arg8[%c0_9, %c0_10], %12 {strides = array<i32>} : memref<256x128xf32, #tpu.memory_space<vmem>>, vector<256x128xf32>,
    %c0_i32_11 = arith.constant 0 : i32
    %14 = arith.cmpi eq, %arg2, %c0_i32_11 : i32
    %15 = arith.extui %14 : i1 to i32
    %c0_i32_12 = arith.constant 0 : i32
    %16 = arith.cmpi ne, %15, %c0_i32_12 : i32
    scf.if %16 {
      %c0_13 = arith.constant 0 : index
      %c0_14 = arith.constant 0 : index
      %17 = vector.load %arg8[%c0_13, %c0_14] : memref<256x128xf32, #tpu.memory_space<vmem>>, vector<256x128xf32>
      %18 = arith.truncf %17 : vector<256x128xf32> to vector<256x128xbf16>
      %c0_15 = arith.constant 0 : index
      %c0_16 = arith.constant 0 : index
      %19 = vector.load %arg5[%c0_15, %c0_16] : memref<256x128xbf16, #tpu.memory_space<vmem>>, vector<256x128xbf16>
      tpu.vector_store %arg5[%c0_15, %c0_16], %18 {strides = array<i32>} : memref<256x128xbf16, #tpu.memory_space<vmem>>, vector<256x128xbf16>,
      %c0_17 = arith.constant 0 : index
      %c0_18 = arith.constant 0 : index
      %20 = vector.load %arg6[%c0_17, %c0_18] : memref<1x128xf32, #tpu.memory_space<vmem>>, vector<1x128xf32>
      %cst_19 = arith.constant dense<0.000000e+00> : vector<128xf32>
      %21 = vector.multi_reduction <add>, %17, %cst_19 [0] : vector<256x128xf32> to vector<128xf32>
      %22 = vector.shape_cast %21 : vector<128xf32> to vector<1x128xf32>
      %23 = arith.addf %20, %22 : vector<1x128xf32>
      %c0_20 = arith.constant 0 : index
      %c0_21 = arith.constant 0 : index
      %24 = vector.load %arg6[%c0_20, %c0_21] : memref<1x128xf32, #tpu.memory_space<vmem>>, vector<1x128xf32>
      tpu.vector_store %arg6[%c0_20, %c0_21], %23 {strides = array<i32>} : memref<1x128xf32, #tpu.memory_space<vmem>>, vector<1x128xf32>,
      %c0_22 = arith.constant 0 : index
      %c0_23 = arith.constant 0 : index
      %25 = vector.load %arg7[%c0_22, %c0_23] : memref<1x128xf32, #tpu.memory_space<vmem>>, vector<1x128xf32>
      %26 = arith.mulf %17, %17 : vector<256x128xf32>
      %cst_24 = arith.constant dense<0.000000e+00> : vector<128xf32>
      %27 = vector.multi_reduction <add>, %26, %cst_24 [0] : vector<256x128xf32> to vector<128xf32>
      %28 = vector.shape_cast %27 : vector<128xf32> to vector<1x128xf32>
      %29 = arith.addf %25, %28 : vector<1x128xf32>
      %c0_25 = arith.constant 0 : index
      %c0_26 = arith.constant 0 : index
      %30 = vector.load %arg7[%c0_25, %c0_26] : memref<1x128xf32, #tpu.memory_space<vmem>>, vector<1x128xf32>
      tpu.vector_store %arg7[%c0_25, %c0_26], %29 {strides = array<i32>} : memref<1x128xf32, #tpu.memory_space<vmem>>, vector<1x128xf32>,
    } else {
    }
    return
  }
  func.func @transform_0(%arg0: i32, %arg1: i32, %arg2: i32) -> (i32, i32) {
    %c0_i32 = arith.constant 0 : i32
    return %arg1, %arg2 : i32, i32
  }
  func.func @transform_1(%arg0: i32, %arg1: i32, %arg2: i32) -> (i32, i32) {
    %c0_i32 = arith.constant 0 : i32
    return %arg2, %arg0 : i32, i32
  }
  func.func @transform_2(%arg0: i32, %arg1: i32, %arg2: i32) -> (i32, i32) {
    %c0_i32 = arith.constant 0 : i32
    return %arg1, %arg0 : i32, i32
  }
  func.func @transform_3(%arg0: i32, %arg1: i32, %arg2: i32) -> (i32, i32) {
    %c0_i32 = arith.constant 0 : i32
    %c0_i32_0 = arith.constant 0 : i32
    return %c0_i32, %arg0 : i32, i32
  }
  func.func @transform_4(%arg0: i32, %arg1: i32, %arg2: i32) -> (i32, i32) {
    %c0_i32 = arith.constant 0 : i32
    %c0_i32_0 = arith.constant 0 : i32
    return %c0_i32, %arg0 : i32, i32
  }
}

</mosaic_0001>

<llo_original>
// kernel: tpu_custom_call.1
$region0: #{tpu_custom_call.1}
  #allocation0 [shape = 'u32[]', space=smem, size = 0x4, offset = 0x4, fixed_abs, tag = 'smem constant byte address 0x4 - core index']
  #allocation1 [shape = 'u32[144,128]{1,0:T(1,128)}', space=vmem, size = 0x12000, scoped, tag = 'internal scratch']
  #allocation2 [shape = 'f32[256,128]{1,0:T(8,128)}', space=vmem, size = 0x20000, scoped, tag = 'scratch operand']
  %s0 = inlined_call_operand.hbm [shape: bf16[512,256], index: 0, kind: input, shape index: {}]
  %s1 = inlined_call_operand.hbm [shape: bf16[256,128], index: 1, kind: input, shape index: {}]
  %s2 = inlined_call_operand.hbm [shape: bf16[512,128], index: 2, kind: output, shape index: {0}]
  %s3 = inlined_call_operand.hbm [shape: f32[1,128], index: 3, kind: output, shape index: {1}]
  %s4 = inlined_call_operand.hbm [shape: f32[1,128], index: 4, kind: output, shape index: {2}]
  %5 = xla_tuple %s2, %s3, %s4
  %s6 = sld [smem:[#allocation0]]
  $region77: #{tpu_custom_call.1} parent=0
    _
  %s8 = ssub.s32 1, %s6
  %s9 = scalar_select 0, %s8, %s6
  $region1: #{tpu_custom_call.1} parent=0
    #allocation3 [shape = 'u8[262144]{0}', space=vmem, size = 0x40000, scoped, tag = 'input window, operand 0']
    #allocation4 [shape = 's32[2]{0}', space=sflag, size = 0x8, scoped, tag = 'scoped memory for tpu_custom_call.1']
    #allocation5 [shape = 's32[2]{0}', space=sflag, size = 0x8, scoped, tag = 'scoped memory for tpu_custom_call.1']
    #allocation6 [shape = 'u8[65536]{0}', space=vmem, size = 0x10000, scoped, tag = 'input window, operand 1, single buffered']
    #allocation7 [shape = 's32[1]{0}', space=sflag, size = 0x4, scoped, tag = 'scoped memory for tpu_custom_call.1']
    #allocation8 [shape = 'u8[131072]{0}', space=vmem, size = 0x20000, scoped, tag = 'output window, operand 0']
    #allocation9 [shape = 'u8[512]{0}', space=vmem, size = 0x400, scoped, tag = 'output window, operand 1, single buffered']
    #allocation10 [shape = 's32[1]{0}', space=sflag, size = 0x4, scoped, tag = 'scoped memory for tpu_custom_call.1']
    #allocation11 [shape = 'u8[512]{0}', space=vmem, size = 0x400, scoped, tag = 'output window, operand 2, single buffered']
    %10 = vsyncpa [#allocation4], 0
    %s11 = scalar_lea.sflag [#allocation4], 1
    %12 = vsyncpa %s11, 0
    %13 = vsyncpa [#allocation7], 0
    %14 = vsyncpa [#allocation5], 0
    %s15 = scalar_lea.sflag [#allocation5], 1
    %16 = vsyncpa %s15, 0
    %17 = vsyncpa [#allocation10], 0
    loop: start=0, step=1, limit=4
    $region2: #{tpu_custom_call.1} parent=1 // loop_pre_header
      _
    $region3: #{tpu_custom_call.1} parent=1 // loop_header
      %s19 = sphi 0, %s23
      %p20 = scmp.ge.s32.totalorder %s19, 4
      %s26 = sphi 0, %s45
      %s27 = sphi 0, %s41
      %s28 = sphi 0, %s37
      %s29 = sphi 0, %s26
      %s30 = sphi 0, %s27
      %s31 = sphi 0, %s28
      %s32 = sphi 0, %s29
      %s33 = sphi 0, %s30
      %s34 = sphi 0, %s31
      %s50 = sphi 0, %s52
      %s53 = sphi 0, %s50
      %s54 = sphi 0, %s53
      %s70 = sphi 0, %s54
      %s78 = sphi 0, %s80
      %s81 = sphi 0, %s78
      %s82 = sphi 0, %s81
      %s98 = sphi 0, %s82
      %s106 = sphi 0, %s108
      %s109 = sphi 0, %s106
      %s110 = sphi 0, %s109
      %s126 = sphi 0, %s110
      %s132 = sphi 0, %s134
      %s135 = sphi 0, %s132
      %s136 = sphi 0, %s135
      %s152 = sphi 0, %s136
      %s158 = sphi 0, %s160
      %s161 = sphi 0, %s158
      %s162 = sphi 0, %s161
      %s178 = sphi 0, %s162
    $region4: #{tpu_custom_call.1} parent=1 // loop_header_branch
      %22 = sbr.rel (%p20) target = $region8
    $region5: #{tpu_custom_call.1} parent=1 // loop_body
      %s24 = ssub.s32 %s19, 1
      %s25 = ssub.s32 %s19, 2
      %s35 = sadd.s32 1, %s28
      %p36 = scmp.ge.s32.totalorder %s35, 1
      %s37 = scalar_select %p36, 0, %s35
      %s38 = sadd.s32 1, %s27
      %s39 = scalar_select %p36, %s38, %s27
      %p40 = scmp.ge.s32.totalorder %s39, 2
      %s41 = scalar_select %p40, 0, %s39
      %s42 = sadd.s32 1, %s26
      %s43 = scalar_select %p40, %s42, %s26
      %p44 = scmp.ge.s32.totalorder %s43, 1
      %s45 = scalar_select %p44, 0, %s43
      %s46 = ssub.s32 %s27, %s41
      %s47 = ssub.s32 %s28, %s37
      %s48 = sor.u32 %s46, %s47
      %p49 = scmp.eq.s32.totalorder %s48, 0
      %s51 = sadd.s32 %s50, 1
      %s52 = scalar_select %p49, %s50, %s51
      %p55 = pneg %p49
      %p56 = scmp.eq.s32.totalorder %s19, 1
      %p57 = por %p55, %p56
      %p58 = scmp.ne.s32.totalorder %s50, %s53
      %p59 = scmp.eq.s32.totalorder %s19, 0
      %p60 = por %p58, %p59
      %p61 = scmp.ne.s32.totalorder %s50, %s53
      %p62 = scmp.eq.s32.totalorder %s24, 1
      %p63 = por %p61, %p62
      %p64 = scmp.ne.s32.totalorder %s53, %s54
      %p65 = scmp.eq.s32.totalorder %s24, 0
      %p66 = por %p64, %p65
      %p67 = scmp.ne.s32.totalorder %s53, %s54
      %p68 = scmp.eq.s32.totalorder %s25, 1
      %p69 = por %p67, %p68
      %p71 = scmp.ne.s32.totalorder %s54, %s70
      %p72 = scmp.eq.s32.totalorder %s25, 0
      %p73 = por %p71, %p72
      %s74 = ssub.s32 %s28, %s37
      %s75 = ssub.s32 %s26, %s45
      %s76 = sor.u32 %s74, %s75
      %p77 = scmp.eq.s32.totalorder %s76, 0
      %s79 = sadd.s32 %s78, 1
      %s80 = scalar_select %p77, %s78, %s79
      %p83 = pneg %p77
      %p84 = scmp.eq.s32.totalorder %s19, 1
      %p85 = por %p83, %p84
      %p86 = scmp.ne.s32.totalorder %s78, %s81
      %p87 = scmp.eq.s32.totalorder %s19, 0
      %p88 = por %p86, %p87
      %p89 = scmp.ne.s32.totalorder %s78, %s81
      %p90 = scmp.eq.s32.totalorder %s24, 1
      %p91 = por %p89, %p90
      %p92 = scmp.ne.s32.totalorder %s81, %s82
      %p93 = scmp.eq.s32.totalorder %s24, 0
      %p94 = por %p92, %p93
      %p95 = scmp.ne.s32.totalorder %s81, %s82
      %p96 = scmp.eq.s32.totalorder %s25, 1
      %p97 = por %p95, %p96
      %p99 = scmp.ne.s32.totalorder %s82, %s98
      %p100 = scmp.eq.s32.totalorder %s25, 0
      %p101 = por %p99, %p100
      %s102 = ssub.s32 %s27, %s41
      %s103 = ssub.s32 %s26, %s45
      %s104 = sor.u32 %s102, %s103
      %p105 = scmp.eq.s32.totalorder %s104, 0
      %s107 = sadd.s32 %s106, 1
      %s108 = scalar_select %p105, %s106, %s107
      %p111 = pneg %p105
      %p112 = scmp.eq.s32.totalorder %s19, 1
      %p113 = por %p111, %p112
      %p114 = scmp.ne.s32.totalorder %s106, %s109
      %p115 = scmp.eq.s32.totalorder %s19, 0
      %p116 = por %p114, %p115
      %p117 = scmp.ne.s32.totalorder %s106, %s109
      %p118 = scmp.eq.s32.totalorder %s24, 1
      %p119 = por %p117, %p118
      %p120 = scmp.ne.s32.totalorder %s109, %s110
      %p121 = scmp.eq.s32.totalorder %s24, 0
      %p122 = por %p120, %p121
      %p123 = scmp.ne.s32.totalorder %s109, %s110
      %p124 = scmp.eq.s32.totalorder %s25, 1
      %p125 = por %p123, %p124
      %p127 = scmp.ne.s32.totalorder %s110, %s126
      %p128 = scmp.eq.s32.totalorder %s25, 0
      %p129 = por %p127, %p128
      %s130 = ssub.s32 %s26, %s45
      %p131 = scmp.eq.s32.totalorder %s130, 0
      %s133 = sadd.s32 %s132, 1
      %s134 = scalar_select %p131, %s132, %s133
      %p137 = pneg %p131
      %p138 = scmp.eq.s32.totalorder %s19, 1
      %p139 = por %p137, %p138
      %p140 = scmp.ne.s32.totalorder %s132, %s135
      %p141 = scmp.eq.s32.totalorder %s19, 0
      %p142 = por %p140, %p141
      %p143 = scmp.ne.s32.totalorder %s132, %s135
      %p144 = scmp.eq.s32.totalorder %s24, 1
      %p145 = por %p143, %p144
      %p146 = scmp.ne.s32.totalorder %s135, %s136
      %p147 = scmp.eq.s32.totalorder %s24, 0
      %p148 = por %p146, %p147
      %p149 = scmp.ne.s32.totalorder %s135, %s136
      %p150 = scmp.eq.s32.totalorder %s25, 1
      %p151 = por %p149, %p150
      %p153 = scmp.ne.s32.totalorder %s136, %s152
      %p154 = scmp.eq.s32.totalorder %s25, 0
      %p155 = por %p153, %p154
      %s156 = ssub.s32 %s26, %s45
      %p157 = scmp.eq.s32.totalorder %s156, 0
      %s159 = sadd.s32 %s158, 1
      %s160 = scalar_select %p157, %s158, %s159
      %p163 = pneg %p157
      %p164 = scmp.eq.s32.totalorder %s19, 1
      %p165 = por %p163, %p164
      %p166 = scmp.ne.s32.totalorder %s158, %s161
      %p167 = scmp.eq.s32.totalorder %s19, 0
      %p168 = por %p166, %p167
      %p169 = scmp.ne.s32.totalorder %s158, %s161
      %p170 = scmp.eq.s32.totalorder %s24, 1
      %p171 = por %p169, %p170
      %p172 = scmp.ne.s32.totalorder %s161, %s162
      %p173 = scmp.eq.s32.totalorder %s24, 0
      %p174 = por %p172, %p173
      %p175 = scmp.ne.s32.totalorder %s161, %s162
      %p176 = scmp.eq.s32.totalorder %s25, 1
      %p177 = por %p175, %p176
      %p179 = scmp.ne.s32.totalorder %s162, %s178
      %p180 = scmp.eq.s32.totalorder %s25, 0
      %p181 = por %p179, %p180
      %p182 = scmp.le.s32.totalorder 1, %s19
      %p183 = scmp.lt.s32.totalorder %s19, 3
      %p184 = pnand %p182, %p183
      %p185 = pneg %p184
      // Predicated region
      $region9: #{tpu_custom_call.1} parent=5 // pred_check
        _
      $region10: #{tpu_custom_call.1} parent=5 // pred_check_branch
        %187 = sbr.rel (%p184) target = $region12
      $region11: #{tpu_custom_call.1} parent=5 // pred_region
        %s188 = ssub.s32 %s19, 1
        // Predicated region
        $region13: #{tpu_custom_call.1} parent=11 // pred_check
          %p189 = pneg %p94
        $region14: #{tpu_custom_call.1} parent=11 // pred_check_branch
          %191 = sbr.rel (%p189) target = $region16
        $region15: #{tpu_custom_call.1} parent=11 // pred_region
          %s192 = smul.u32 32, %s31
          %s194 = ssub.s32 2048, 2048
          %195 = vsyncadd [#allocation7], %s194
          %s196 = sadd.s32 %s29, %s192
          %s197 = smul.addr %s196, 64
          %s198 = scalar_lea.hbm %s1, %s197
          %s199 = sshll.u32 [#allocation6], 4
          %s200 = int_to_ptr.vmem [resolvable:$true] %s199
          %205 = dma.hbm_to_vmem [thread:$0]  %s198, 2048, %s200, [#allocation7], 64, 64, 4
        $region16: #{tpu_custom_call.1} parent=11 // pred_fallthru
          _
      $region12: #{tpu_custom_call.1} parent=5 // pred_fallthru
        _
      %p206 = scmp.lt.s32.totalorder %s19, 2
      // Predicated region
      $region17: #{tpu_custom_call.1} parent=5 // pred_check
        %p207 = pneg %p206
      $region18: #{tpu_custom_call.1} parent=5 // pred_check_branch
        %209 = sbr.rel (%p207) target = $region20
      $region19: #{tpu_custom_call.1} parent=5 // pred_region
        // Predicated region
        $region21: #{tpu_custom_call.1} parent=19 // pred_check
          %p210 = pneg %p60
        $region22: #{tpu_custom_call.1} parent=19 // pred_check_branch
          %212 = sbr.rel (%p210) target = $region24
        $region23: #{tpu_custom_call.1} parent=19 // pred_region
          %s213 = sand.u32 %s50, 1
          %s214 = scalar_lea.sflag [#allocation4], %s213
          %s215 = sand.u32 %s50, 1
          %s216 = smul.addr %s215, 256
          %s217 = scalar_lea.vmem [#allocation3], %s216
          %s218 = smul.u32 32, %s27
          %s219 = smul.u32 2, %s28
          %s221 = ssub.s32 4096, 4096
          %222 = vsyncadd %s214, %s221
          %s223 = smul.addr %s218, 2
          %s224 = sadd.s32 %s219, %s223
          %s225 = smul.addr %s224, 64
          %s226 = scalar_lea.hbm %s0, %s225
          %s227 = sshll.u32 %s217, 4
          %s228 = int_to_ptr.vmem [resolvable:$true] %s227
          %233 = dma.hbm_to_vmem [thread:$0]  %s226, 4096, %s228, %s214, 128, 128, 8
        $region24: #{tpu_custom_call.1} parent=19 // pred_fallthru
          _
      $region20: #{tpu_custom_call.1} parent=5 // pred_fallthru
        _
      %p234 = scmp.le.s32.totalorder 1, %s19
      %p235 = scmp.lt.s32.totalorder %s19, 3
      %p236 = pnand %p234, %p235
      %p237 = pneg %p236
      // Predicated region
      $region25: #{tpu_custom_call.1} parent=5 // pred_check
        _
      $region26: #{tpu_custom_call.1} parent=5 // pred_check_branch
        %239 = sbr.rel (%p236) target = $region28
      $region27: #{tpu_custom_call.1} parent=5 // pred_region
        %s240 = ssub.s32 %s19, 1
        %s241 = sand.u32 %s53, 1
        %s242 = scalar_lea.sflag [#allocation4], %s241
        %s243 = sand.u32 %s53, 1
        %s244 = smul.addr %s243, 256
        %s245 = scalar_lea.vmem [#allocation3], %s244
        // Predicated region
        $region29: #{tpu_custom_call.1} parent=27 // pred_check
          %p246 = pneg %p66
        $region30: #{tpu_custom_call.1} parent=27 // pred_check_branch
          %248 = sbr.rel (%p246) target = $region32
        $region31: #{tpu_custom_call.1} parent=27 // pred_region
          %249 = dma.done %s242, 4096
        $region32: #{tpu_custom_call.1} parent=27 // pred_fallthru
          _
        // Predicated region
        $region33: #{tpu_custom_call.1} parent=27 // pred_check
          %p250 = pneg %p94
        $region34: #{tpu_custom_call.1} parent=27 // pred_check_branch
          %252 = sbr.rel (%p250) target = $region36
        $region35: #{tpu_custom_call.1} parent=27 // pred_region
          %253 = dma.done [#allocation7], 2048
        $region36: #{tpu_custom_call.1} parent=27 // pred_fallthru
          _
        %s254 = sand.u32 %s53, 1
        %s255 = scalar_lea.sflag [#allocation4], %s254
        %s256 = sand.u32 %s53, 1
        %s257 = smul.addr %s256, 256
        %s258 = scalar_lea.vmem [#allocation3], %s257
        %p259 = pneg %p66
        %p260 = pneg %p63
        %p261 = pneg %p94
        %p262 = pneg %p91
        %p263 = pneg %p122
        %p264 = pneg %p119
        %s265 = sand.u32 %s109, 1
        %s266 = scalar_lea.sflag [#allocation5], %s265
        %s267 = sand.u32 %s109, 1
        %s268 = smul.addr %s267, 128
        %s269 = scalar_lea.vmem [#allocation8], %s268
        %p270 = pneg %p148
        %p271 = pneg %p145
        %p272 = pneg %p174
        %p273 = pneg %p171
        %s274 = smul.u32 32, %s30
        %s275 = smul.u32 2, %s31
        %s276 = smul.u32 32, %s31
        %s277 = smul.u32 32, %s30
        %p279 = scmp.eq.s32.totalorder %s31, 0
        // Predicated region
        $region37: #{tpu_custom_call.1} parent=27 // pred_check
          %p280 = pneg %p279
        $region38: #{tpu_custom_call.1} parent=27 // pred_check_branch
          %282 = sbr.rel (%p280) target = $region40
        $region39: #{tpu_custom_call.1} parent=27 // pred_region
          %283 = vst [vmem:[#allocation2] sm:$0xff] 0.0
          %284 = vst [vmem:[#allocation2 + $0x8] sm:$0xff] 0.0
          %285 = vst [vmem:[#allocation2 + $0x10] sm:$0xff] 0.0
          %286 = vst [vmem:[#allocation2 + $0x18] sm:$0xff] 0.0
          %287 = vst [vmem:[#allocation2 + $0x20] sm:$0xff] 0.0
          %288 = vst [vmem:[#allocation2 + $0x28] sm:$0xff] 0.0
          %289 = vst [vmem:[#allocation2 + $0x30] sm:$0xff] 0.0
          %290 = vst [vmem:[#allocation2 + $0x38] sm:$0xff] 0.0
          %291 = vst [vmem:[#allocation2 + $0x40] sm:$0xff] 0.0
          %292 = vst [vmem:[#allocation2 + $0x48] sm:$0xff] 0.0
          %293 = vst [vmem:[#allocation2 + $0x50] sm:$0xff] 0.0
          %294 = vst [vmem:[#allocation2 + $0x58] sm:$0xff] 0.0
          %295 = vst [vmem:[#allocation2 + $0x60] sm:$0xff] 0.0
          %296 = vst [vmem:[#allocation2 + $0x68] sm:$0xff] 0.0
          %297 = vst [vmem:[#allocation2 + $0x70] sm:$0xff] 0.0
          %298 = vst [vmem:[#allocation2 + $0x78] sm:$0xff] 0.0
          %299 = vst [vmem:[#allocation2 + $0x80] sm:$0xff] 0.0
          %300 = vst [vmem:[#allocation2 + $0x88] sm:$0xff] 0.0
          %301 = vst [vmem:[#allocation2 + $0x90] sm:$0xff] 0.0
          %302 = vst [vmem:[#allocation2 + $0x98] sm:$0xff] 0.0
          %303 = vst [vmem:[#allocation2 + $0xa0] sm:$0xff] 0.0
          %304 = vst [vmem:[#allocation2 + $0xa8] sm:$0xff] 0.0
          %305 = vst [vmem:[#allocation2 + $0xb0] sm:$0xff] 0.0
          %306 = vst [vmem:[#allocation2 + $0xb8] sm:$0xff] 0.0
          %307 = vst [vmem:[#allocation2 + $0xc0] sm:$0xff] 0.0
          %308 = vst [vmem:[#allocation2 + $0xc8] sm:$0xff] 0.0
          %309 = vst [vmem:[#allocation2 + $0xd0] sm:$0xff] 0.0
          %310 = vst [vmem:[#allocation2 + $0xd8] sm:$0xff] 0.0
          %311 = vst [vmem:[#allocation2 + $0xe0] sm:$0xff] 0.0
          %312 = vst [vmem:[#allocation2 + $0xe8] sm:$0xff] 0.0
          %313 = vst [vmem:[#allocation2 + $0xf0] sm:$0xff] 0.0
          %314 = vst [vmem:[#allocation2 + $0xf8] sm:$0xff] 0.0
        $region40: #{tpu_custom_call.1} parent=27 // pred_fallthru
          _
        %p315 = scmp.eq.s32.totalorder %s30, 0
        %p316 = pnand %p315, %p279
        %p317 = pneg %p316
        // Predicated region
        $region41: #{tpu_custom_call.1} parent=27 // pred_check
          _
        $region42: #{tpu_custom_call.1} parent=27 // pred_check_branch
          %319 = sbr.rel (%p316) target = $region44
        $region43: #{tpu_custom_call.1} parent=27 // pred_region
          %320 = vst [vmem:[#allocation9] sm:$0x1] 0.0
          %321 = vst [vmem:[#allocation11] sm:$0x1] 0.0
        $region44: #{tpu_custom_call.1} parent=27 // pred_fallthru
          _
        %v322 = vld [vmem:[#allocation2] sm:$0xff]
        %v323 = vld [vmem:[#allocation2 + $0x8] sm:$0xff]
        %v324 = vld [vmem:[#allocation2 + $0x10] sm:$0xff]
        %v325 = vld [vmem:[#allocation2 + $0x18] sm:$0xff]
        %v326 = vld [vmem:[#allocation2 + $0x20] sm:$0xff]
        %v327 = vld [vmem:[#allocation2 + $0x28] sm:$0xff]
        %v328 = vld [vmem:[#allocation2 + $0x30] sm:$0xff]
        %v329 = vld [vmem:[#allocation2 + $0x38] sm:$0xff]
        %v330 = vld [vmem:[#allocation2 + $0x40] sm:$0xff]
        %v331 = vld [vmem:[#allocation2 + $0x48] sm:$0xff]
        %v332 = vld [vmem:[#allocation2 + $0x50] sm:$0xff]
        %v333 = vld [vmem:[#allocation2 + $0x58] sm:$0xff]
        %v334 = vld [vmem:[#allocation2 + $0x60] sm:$0xff]
        %v335 = vld [vmem:[#allocation2 + $0x68] sm:$0xff]
        %v336 = vld [vmem:[#allocation2 + $0x70] sm:$0xff]
        %v337 = vld [vmem:[#allocation2 + $0x78] sm:$0xff]
        %v338 = vld [vmem:[#allocation2 + $0x80] sm:$0xff]
        %v339 = vld [vmem:[#allocation2 + $0x88] sm:$0xff]
        %v340 = vld [vmem:[#allocation2 + $0x90] sm:$0xff]
        %v341 = vld [vmem:[#allocation2 + $0x98] sm:$0xff]
        %v342 = vld [vmem:[#allocation2 + $0xa0] sm:$0xff]
        %v343 = vld [vmem:[#allocation2 + $0xa8] sm:$0xff]
        %v344 = vld [vmem:[#allocation2 + $0xb0] sm:$0xff]
        %v345 = vld [vmem:[#allocation2 + $0xb8] sm:$0xff]
        %v346 = vld [vmem:[#allocation2 + $0xc0] sm:$0xff]
        %v347 = vld [vmem:[#allocation2 + $0xc8] sm:$0xff]
        %v348 = vld [vmem:[#allocation2 + $0xd0] sm:$0xff]
        %v349 = vld [vmem:[#allocation2 + $0xd8] sm:$0xff]
        %v350 = vld [vmem:[#allocation2 + $0xe0] sm:$0xff]
        %v351 = vld [vmem:[#allocation2 + $0xe8] sm:$0xff]
        %v352 = vld [vmem:[#allocation2 + $0xf0] sm:$0xff]
        %v353 = vld [vmem:[#allocation2 + $0xf8] sm:$0xff]
        %v354 = vld [vmem:[%s245] sm:$0xff]
        %v355 = vld [vmem:[%s245 + $0x8] sm:$0xff]
        %v356 = vld [vmem:[%s245 + $0x10] sm:$0xff]
        %v357 = vld [vmem:[%s245 + $0x18] sm:$0xff]
        %v358 = vld [vmem:[%s245 + $0x20] sm:$0xff]
        %v359 = vld [vmem:[%s245 + $0x28] sm:$0xff]
        %v360 = vld [vmem:[%s245 + $0x30] sm:$0xff]
        %v361 = vld [vmem:[%s245 + $0x38] sm:$0xff]
        %v362 = vld [vmem:[%s245 + $0x40] sm:$0xff]
        %v363 = vld [vmem:[%s245 + $0x48] sm:$0xff]
        %v364 = vld [vmem:[%s245 + $0x50] sm:$0xff]
        %v365 = vld [vmem:[%s245 + $0x58] sm:$0xff]
        %v366 = vld [vmem:[%s245 + $0x60] sm:$0xff]
        %v367 = vld [vmem:[%s245 + $0x68] sm:$0xff]
        %v368 = vld [vmem:[%s245 + $0x70] sm:$0xff]
        %v369 = vld [vmem:[%s245 + $0x78] sm:$0xff]
        %v370 = vld [vmem:[%s245 + $0x80] sm:$0xff]
        %v371 = vld [vmem:[%s245 + $0x88] sm:$0xff]
        %v372 = vld [vmem:[%s245 + $0x90] sm:$0xff]
        %v373 = vld [vmem:[%s245 + $0x98] sm:$0xff]
        %v374 = vld [vmem:[%s245 + $0xa0] sm:$0xff]
        %v375 = vld [vmem:[%s245 + $0xa8] sm:$0xff]
        %v376 = vld [vmem:[%s245 + $0xb0] sm:$0xff]
        %v377 = vld [vmem:[%s245 + $0xb8] sm:$0xff]
        %v378 = vld [vmem:[%s245 + $0xc0] sm:$0xff]
        %v379 = vld [vmem:[%s245 + $0xc8] sm:$0xff]
        %v380 = vld [vmem:[%s245 + $0xd0] sm:$0xff]
        %v381 = vld [vmem:[%s245 + $0xd8] sm:$0xff]
        %v382 = vld [vmem:[%s245 + $0xe0] sm:$0xff]
        %v383 = vld [vmem:[%s245 + $0xe8] sm:$0xff]
        %v384 = vld [vmem:[%s245 + $0xf0] sm:$0xff]
        %v385 = vld [vmem:[%s245 + $0xf8] sm:$0xff]
        %v386 = vld [vmem:[#allocation6] sm:$0xf]
        %v387 = vld [vmem:[#allocation6 + $0x4] sm:$0xf]
        %v388 = vld [vmem:[#allocation6 + $0x8] sm:$0xf]
        %v389 = vld [vmem:[#allocation6 + $0xc] sm:$0xf]
        %v390 = vld [vmem:[#allocation6 + $0x10] sm:$0xf]
        %v391 = vld [vmem:[#allocation6 + $0x14] sm:$0xf]
        %v392 = vld [vmem:[#allocation6 + $0x18] sm:$0xf]
        %v393 = vld [vmem:[#allocation6 + $0x1c] sm:$0xf]
        %v394 = vld [vmem:[#allocation6 + $0x20] sm:$0xf]
        %v395 = vld [vmem:[#allocation6 + $0x24] sm:$0xf]
        %v396 = vld [vmem:[#allocation6 + $0x28] sm:$0xf]
        %v397 = vld [vmem:[#allocation6 + $0x2c] sm:$0xf]
        %v398 = vld [vmem:[#allocation6 + $0x30] sm:$0xf]
        %v399 = vld [vmem:[#allocation6 + $0x34] sm:$0xf]
        %v400 = vld [vmem:[#allocation6 + $0x38] sm:$0xf]
        %v401 = vld [vmem:[#allocation6 + $0x3c] sm:$0xf]
        %v402 = vld [vmem:[#allocation6 + $0x40] sm:$0xf]
        %v403 = vld [vmem:[#allocation6 + $0x44] sm:$0xf]
        %v404 = vld [vmem:[#allocation6 + $0x48] sm:$0xf]
        %v405 = vld [vmem:[#allocation6 + $0x4c] sm:$0xf]
        %v406 = vld [vmem:[#allocation6 + $0x50] sm:$0xf]
        %v407 = vld [vmem:[#allocation6 + $0x54] sm:$0xf]
        %v408 = vld [vmem:[#allocation6 + $0x58] sm:$0xf]
        %v409 = vld [vmem:[#allocation6 + $0x5c] sm:$0xf]
        %v410 = vld [vmem:[#allocation6 + $0x60] sm:$0xf]
        %v411 = vld [vmem:[#allocation6 + $0x64] sm:$0xf]
        %v412 = vld [vmem:[#allocation6 + $0x68] sm:$0xf]
        %v413 = vld [vmem:[#allocation6 + $0x6c] sm:$0xf]
        %v414 = vld [vmem:[#allocation6 + $0x70] sm:$0xf]
        %v415 = vld [vmem:[#allocation6 + $0x74] sm:$0xf]
        %v416 = vld [vmem:[#allocation6 + $0x78] sm:$0xf]
        %v417 = vld [vmem:[#allocation6 + $0x7c] sm:$0xf]
        %v450 = vunpack.c.l.b16 %v354
        %v451 = vunpack.c.h.b16 %v354
        %v452 = vunpack.c.l.b16 %v355
        %v453 = vunpack.c.h.b16 %v355
        %v454 = vunpack.c.l.b16 %v356
        %v455 = vunpack.c.h.b16 %v356
        %v456 = vunpack.c.l.b16 %v357
        %v457 = vunpack.c.h.b16 %v357
        %v458 = vunpack.c.l.b16 %v358
        %v459 = vunpack.c.h.b16 %v358
        %v460 = vunpack.c.l.b16 %v359
        %v461 = vunpack.c.h.b16 %v359
        %v462 = vunpack.c.l.b16 %v360
        %v463 = vunpack.c.h.b16 %v360
        %v464 = vunpack.c.l.b16 %v361
        %v465 = vunpack.c.h.b16 %v361
        %v466 = vunpack.c.l.b16 %v362
        %v467 = vunpack.c.h.b16 %v362
        %v468 = vunpack.c.l.b16 %v363
        %v469 = vunpack.c.h.b16 %v363
        %v470 = vunpack.c.l.b16 %v364
        %v471 = vunpack.c.h.b16 %v364
        %v472 = vunpack.c.l.b16 %v365
        %v473 = vunpack.c.h.b16 %v365
        %v474 = vunpack.c.l.b16 %v366
        %v475 = vunpack.c.h.b16 %v366
        %v476 = vunpack.c.l.b16 %v367
        %v477 = vunpack.c.h.b16 %v367
        %v478 = vunpack.c.l.b16 %v368
        %v479 = vunpack.c.h.b16 %v368
        %v480 = vunpack.c.l.b16 %v369
        %v481 = vunpack.c.h.b16 %v369
        %v482 = vunpack.c.l.b16 %v370
        %v483 = vunpack.c.h.b16 %v370
        %v484 = vunpack.c.l.b16 %v371
        %v485 = vunpack.c.h.b16 %v371
        %v486 = vunpack.c.l.b16 %v372
        %v487 = vunpack.c.h.b16 %v372
        %v488 = vunpack.c.l.b16 %v373
        %v489 = vunpack.c.h.b16 %v373
        %v490 = vunpack.c.l.b16 %v374
        %v491 = vunpack.c.h.b16 %v374
        %v492 = vunpack.c.l.b16 %v375
        %v493 = vunpack.c.h.b16 %v375
        %v494 = vunpack.c.l.b16 %v376
        %v495 = vunpack.c.h.b16 %v376
        %v496 = vunpack.c.l.b16 %v377
        %v497 = vunpack.c.h.b16 %v377
        %v498 = vunpack.c.l.b16 %v378
        %v499 = vunpack.c.h.b16 %v378
        %v500 = vunpack.c.l.b16 %v379
        %v501 = vunpack.c.h.b16 %v379
        %v502 = vunpack.c.l.b16 %v380
        %v503 = vunpack.c.h.b16 %v380
        %v504 = vunpack.c.l.b16 %v381
        %v505 = vunpack.c.h.b16 %v381
        %v506 = vunpack.c.l.b16 %v382
        %v507 = vunpack.c.h.b16 %v382
        %v508 = vunpack.c.l.b16 %v383
        %v509 = vunpack.c.h.b16 %v383
        %v510 = vunpack.c.l.b16 %v384
        %v511 = vunpack.c.h.b16 %v384
        %v512 = vunpack.c.l.b16 %v385
        %v513 = vunpack.c.h.b16 %v385
        %v514 = vpack.c.b16 %v452, %v450
        %v515 = vpack.c.b16 %v453, %v451
        %v516 = vpack.c.b16 %v456, %v454
        %v517 = vpack.c.b16 %v457, %v455
        %v518 = vpack.c.b16 %v460, %v458
        %v519 = vpack.c.b16 %v461, %v459
        %v520 = vpack.c.b16 %v464, %v462
        %v521 = vpack.c.b16 %v465, %v463
        %v522 = vpack.c.b16 %v468, %v466
        %v523 = vpack.c.b16 %v469, %v467
        %v524 = vpack.c.b16 %v472, %v470
        %v525 = vpack.c.b16 %v473, %v471
        %v526 = vpack.c.b16 %v476, %v474
        %v527 = vpack.c.b16 %v477, %v475
        %v528 = vpack.c.b16 %v480, %v478
        %v529 = vpack.c.b16 %v481, %v479
        %v530 = vpack.c.b16 %v484, %v482
        %v531 = vpack.c.b16 %v485, %v483
        %v532 = vpack.c.b16 %v488, %v486
        %v533 = vpack.c.b16 %v489, %v487
        %v534 = vpack.c.b16 %v492, %v490
        %v535 = vpack.c.b16 %v493, %v491
        %v536 = vpack.c.b16 %v496, %v494
        %v537 = vpack.c.b16 %v497, %v495
        %v538 = vpack.c.b16 %v500, %v498
        %v539 = vpack.c.b16 %v501, %v499
        %v540 = vpack.c.b16 %v504, %v502
        %v541 = vpack.c.b16 %v505, %v503
        %v542 = vpack.c.b16 %v508, %v506
        %v543 = vpack.c.b16 %v509, %v507
        %v544 = vpack.c.b16 %v512, %v510
        %v545 = vpack.c.b16 %v513, %v511
        %v610 = vunpack.c.l.b16 %v386
        %v611 = vunpack.c.l.b16 %v387
        %v612 = vunpack.c.l.b16 %v388
        %v613 = vunpack.c.l.b16 %v389
        %v614 = vunpack.c.l.b16 %v390
        %v615 = vunpack.c.l.b16 %v391
        %v616 = vunpack.c.l.b16 %v392
        %v617 = vunpack.c.l.b16 %v393
        %v618 = vunpack.c.l.b16 %v394
        %v619 = vunpack.c.l.b16 %v395
        %v620 = vunpack.c.l.b16 %v396
        %v621 = vunpack.c.l.b16 %v397
        %v622 = vunpack.c.l.b16 %v398
        %v623 = vunpack.c.l.b16 %v399
        %v624 = vunpack.c.l.b16 %v400
        %v625 = vunpack.c.l.b16 %v401
        %v626 = vunpack.c.l.b16 %v402
        %v627 = vunpack.c.l.b16 %v403
        %v628 = vunpack.c.l.b16 %v404
        %v629 = vunpack.c.l.b16 %v405
        %v630 = vunpack.c.l.b16 %v406
        %v631 = vunpack.c.l.b16 %v407
        %v632 = vunpack.c.l.b16 %v408
        %v633 = vunpack.c.l.b16 %v409
        %v634 = vunpack.c.l.b16 %v410
        %v635 = vunpack.c.l.b16 %v411
        %v636 = vunpack.c.l.b16 %v412
        %v637 = vunpack.c.l.b16 %v413
        %v638 = vunpack.c.l.b16 %v414
        %v639 = vunpack.c.l.b16 %v415
        %v640 = vunpack.c.l.b16 %v416
        %v641 = vunpack.c.l.b16 %v417
        %v642 = vpack.c.b16 %v611, %v610
        %v643 = vpack.c.b16 %v613, %v612
        %v644 = vpack.c.b16 %v615, %v614
        %v645 = vpack.c.b16 %v617, %v616
        %v646 = vpack.c.b16 %v619, %v618
        %v647 = vpack.c.b16 %v621, %v620
        %v648 = vpack.c.b16 %v623, %v622
        %v649 = vpack.c.b16 %v625, %v624
        %v650 = vpack.c.b16 %v627, %v626
        %v651 = vpack.c.b16 %v629, %v628
        %v652 = vpack.c.b16 %v631, %v630
        %v653 = vpack.c.b16 %v633, %v632
        %v654 = vpack.c.b16 %v635, %v634
        %v655 = vpack.c.b16 %v637, %v636
        %v656 = vpack.c.b16 %v639, %v638
        %v657 = vpack.c.b16 %v641, %v640
        %674 = vmatprep.subr.bf16.mxu0 0
        %675 = vmatpush1.bf16.msra.mxu0 %v642
        %676 = vmatprep.subr.bf16.mxu0 0
        %677 = vmatpush1.bf16.msra.mxu0 %v643
        %678 = vmatprep.subr.bf16.mxu0 0
        %679 = vmatpush1.bf16.msra.mxu0 %v644
        %680 = vmatprep.subr.bf16.mxu0 0
        %681 = vmatpush1.bf16.msra.mxu0 %v645
        %682 = vmatprep.subr.bf16.mxu0 0
        %683 = vmatpush1.bf16.msra.mxu0 %v646
        %684 = vmatprep.subr.bf16.mxu0 0
        %685 = vmatpush1.bf16.msra.mxu0 %v647
        %686 = vmatprep.subr.bf16.mxu0 0
        %687 = vmatpush1.bf16.msra.mxu0 %v648
        %688 = vmatprep.subr.bf16.mxu0 0
        %689 = vmatpush1.bf16.msra.mxu0 %v649
        %690 = vmatprep.subr.bf16.mxu0 0
        %691 = vmatpush1.bf16.msra.mxu0 %v650
        %692 = vmatprep.subr.bf16.mxu0 0
        %693 = vmatpush1.bf16.msra.mxu0 %v651
        %694 = vmatprep.subr.bf16.mxu0 0
        %695 = vmatpush1.bf16.msra.mxu0 %v652
        %696 = vmatprep.subr.bf16.mxu0 0
        %697 = vmatpush1.bf16.msra.mxu0 %v653
        %698 = vmatprep.subr.bf16.mxu0 0
        %699 = vmatpush1.bf16.msra.mxu0 %v654
        %700 = vmatprep.subr.bf16.mxu0 0
        %701 = vmatpush1.bf16.msra.mxu0 %v655
        %702 = vmatprep.subr.bf16.mxu0 0
        %703 = vmatpush1.bf16.msra.mxu0 %v656
        %704 = vmatprep.subr.bf16.mxu0 0
        %705 = vmatpush1.bf16.msra.mxu0 %v657
        %706 = vmatprep.mubr.bf16.mxu0 %v515
        %707 = vmatmul.mubr.bf16.gmra.mrb[0].mxu0 %v514
        %v708 = vpop.f32.mrb[0].mxu0
        %v709 = vadd.f32 0.0, %v708
        %v710 = vpop.f32.mrb[0].mxu0
        %v711 = vpop.f32.mrb[0].mxu0
        %v712 = vadd.f32 0.0, %v711
        %v713 = vpop.f32.mrb[0].mxu0
        %714 = vmatprep.mubr.bf16.mxu0 %v517
        %715 = vmatmul.mubr.bf16.gmra.mrb[0].mxu0 %v516
        %v716 = vpop.f32.mrb[0].mxu0
        %v717 = vadd.f32 0.0, %v716
        %v718 = vpop.f32.mrb[0].mxu0
        %v719 = vpop.f32.mrb[0].mxu0
        %v720 = vadd.f32 0.0, %v719
        %v721 = vpop.f32.mrb[0].mxu0
        %722 = vmatprep.mubr.bf16.mxu0 %v519
        %723 = vmatmul.mubr.bf16.gmra.mrb[0].mxu0 %v518
        %v724 = vpop.f32.mrb[0].mxu0
        %v725 = vadd.f32 0.0, %v724
        %v726 = vpop.f32.mrb[0].mxu0
        %v727 = vpop.f32.mrb[0].mxu0
        %v728 = vadd.f32 0.0, %v727
        %v729 = vpop.f32.mrb[0].mxu0
        %730 = vmatprep.mubr.bf16.mxu0 %v521
        %731 = vmatmul.mubr.bf16.gmra.mrb[0].mxu0 %v520
        %v732 = vpop.f32.mrb[0].mxu0
        %v733 = vadd.f32 0.0, %v732
        %v734 = vpop.f32.mrb[0].mxu0
        %v735 = vpop.f32.mrb[0].mxu0
        %v736 = vadd.f32 0.0, %v735
        %v737 = vpop.f32.mrb[0].mxu0
        %738 = vmatprep.mubr.bf16.mxu0 %v523
        %739 = vmatmul.mubr.bf16.gmra.mrb[0].mxu0 %v522
        %v740 = vpop.f32.mrb[0].mxu0
        %v741 = vadd.f32 0.0, %v740
        %v742 = vpop.f32.mrb[0].mxu0
        %v743 = vpop.f32.mrb[0].mxu0
        %v744 = vadd.f32 0.0, %v743
        %v745 = vpop.f32.mrb[0].mxu0
        %746 = vmatprep.mubr.bf16.mxu0 %v525
        %747 = vmatmul.mubr.bf16.gmra.mrb[0].mxu0 %v524
        %v748 = vpop.f32.mrb[0].mxu0
        %v749 = vadd.f32 0.0, %v748
        %v750 = vpop.f32.mrb[0].mxu0
        %v751 = vpop.f32.mrb[0].mxu0
        %v752 = vadd.f32 0.0, %v751
        %v753 = vpop.f32.mrb[0].mxu0
        %754 = vmatprep.mubr.bf16.mxu0 %v527
        %755 = vmatmul.mubr.bf16.gmra.mrb[0].mxu0 %v526
        %v756 = vpop.f32.mrb[0].mxu0
        %v757 = vadd.f32 0.0, %v756
        %v758 = vpop.f32.mrb[0].mxu0
        %v759 = vpop.f32.mrb[0].mxu0
        %v760 = vadd.f32 0.0, %v759
        %v761 = vpop.f32.mrb[0].mxu0
        %762 = vmatprep.mubr.bf16.mxu0 %v529
        %763 = vmatmul.mubr.bf16.gmra.mrb[0].mxu0 %v528
        %v764 = vpop.f32.mrb[0].mxu0
        %v765 = vadd.f32 0.0, %v764
        %v766 = vpop.f32.mrb[0].mxu0
        %v767 = vpop.f32.mrb[0].mxu0
        %v768 = vadd.f32 0.0, %v767
        %v769 = vpop.f32.mrb[0].mxu0
        %770 = vmatprep.mubr.bf16.mxu0 %v531
        %771 = vmatmul.mubr.bf16.gmra.mrb[0].mxu0 %v530
        %v772 = vpop.f32.mrb[0].mxu0
        %v773 = vadd.f32 0.0, %v772
        %v774 = vpop.f32.mrb[0].mxu0
        %v775 = vpop.f32.mrb[0].mxu0
        %v776 = vadd.f32 0.0, %v775
        %v777 = vpop.f32.mrb[0].mxu0
        %778 = vmatprep.mubr.bf16.mxu0 %v533
        %779 = vmatmul.mubr.bf16.gmra.mrb[0].mxu0 %v532
        %v780 = vpop.f32.mrb[0].mxu0
        %v781 = vadd.f32 0.0, %v780
        %v782 = vpop.f32.mrb[0].mxu0
        %v783 = vpop.f32.mrb[0].mxu0
        %v784 = vadd.f32 0.0, %v783
        %v785 = vpop.f32.mrb[0].mxu0
        %786 = vmatprep.mubr.bf16.mxu0 %v535
        %787 = vmatmul.mubr.bf16.gmra.mrb[0].mxu0 %v534
        %v788 = vpop.f32.mrb[0].mxu0
        %v789 = vadd.f32 0.0, %v788
        %v790 = vpop.f32.mrb[0].mxu0
        %v791 = vpop.f32.mrb[0].mxu0
        %v792 = vadd.f32 0.0, %v791
        %v793 = vpop.f32.mrb[0].mxu0
        %794 = vmatprep.mubr.bf16.mxu0 %v537
        %795 = vmatmul.mubr.bf16.gmra.mrb[0].mxu0 %v536
        %v796 = vpop.f32.mrb[0].mxu0
        %v797 = vadd.f32 0.0, %v796
        %v798 = vpop.f32.mrb[0].mxu0
        %v799 = vpop.f32.mrb[0].mxu0
        %v800 = vadd.f32 0.0, %v799
        %v801 = vpop.f32.mrb[0].mxu0
        %802 = vmatprep.mubr.bf16.mxu0 %v539
        %803 = vmatmul.mubr.bf16.gmra.mrb[0].mxu0 %v538
        %v804 = vpop.f32.mrb[0].mxu0
        %v805 = vadd.f32 0.0, %v804
        %v806 = vpop.f32.mrb[0].mxu0
        %v807 = vpop.f32.mrb[0].mxu0
        %v808 = vadd.f32 0.0, %v807
        %v809 = vpop.f32.mrb[0].mxu0
        %810 = vmatprep.mubr.bf16.mxu0 %v541
        %811 = vmatmul.mubr.bf16.gmra.mrb[0].mxu0 %v540
        %v812 = vpop.f32.mrb[0].mxu0
        %v813 = vadd.f32 0.0, %v812
        %v814 = vpop.f32.mrb[0].mxu0
        %v815 = vpop.f32.mrb[0].mxu0
        %v816 = vadd.f32 0.0, %v815
        %v817 = vpop.f32.mrb[0].mxu0
        %818 = vmatprep.mubr.bf16.mxu0 %v543
        %819 = vmatmul.mubr.bf16.gmra.mrb[0].mxu0 %v542
        %v820 = vpop.f32.mrb[0].mxu0
        %v821 = vadd.f32 0.0, %v820
        %v822 = vpop.f32.mrb[0].mxu0
        %v823 = vpop.f32.mrb[0].mxu0
        %v824 = vadd.f32 0.0, %v823
        %v825 = vpop.f32.mrb[0].mxu0
        %826 = vmatprep.mubr.bf16.mxu0 %v545
        %827 = vmatmul.mubr.bf16.gmra.mrb[0].mxu0 %v544
        %v828 = vpop.f32.mrb[0].mxu0
        %v829 = vadd.f32 0.0, %v828
        %v830 = vpop.f32.mrb[0].mxu0
        %v831 = vpop.f32.mrb[0].mxu0
        %v832 = vadd.f32 0.0, %v831
        %v833 = vpop.f32.mrb[0].mxu0
        %834 = vdwg.mxu0
        %v835 = vadd.f32 %v322, %v709
        %v836 = vadd.f32 %v323, %v712
        %v837 = vadd.f32 %v324, %v717
        %v838 = vadd.f32 %v325, %v720
        %v839 = vadd.f32 %v326, %v725
        %v840 = vadd.f32 %v327, %v728
        %v841 = vadd.f32 %v328, %v733
        %v842 = vadd.f32 %v329, %v736
        %v843 = vadd.f32 %v330, %v741
        %v844 = vadd.f32 %v331, %v744
        %v845 = vadd.f32 %v332, %v749
        %v846 = vadd.f32 %v333, %v752
        %v847 = vadd.f32 %v334, %v757
        %v848 = vadd.f32 %v335, %v760
        %v849 = vadd.f32 %v336, %v765
        %v850 = vadd.f32 %v337, %v768
        %v851 = vadd.f32 %v338, %v773
        %v852 = vadd.f32 %v339, %v776
        %v853 = vadd.f32 %v340, %v781
        %v854 = vadd.f32 %v341, %v784
        %v855 = vadd.f32 %v342, %v789
        %v856 = vadd.f32 %v343, %v792
        %v857 = vadd.f32 %v344, %v797
        %v858 = vadd.f32 %v345, %v800
        %v859 = vadd.f32 %v346, %v805
        %v860 = vadd.f32 %v347, %v808
        %v861 = vadd.f32 %v348, %v813
        %v862 = vadd.f32 %v349, %v816
        %v863 = vadd.f32 %v350, %v821
        %v864 = vadd.f32 %v351, %v824
        %v865 = vadd.f32 %v352, %v829
        %v866 = vadd.f32 %v353, %v832
        %867 = vst [vmem:[#allocation2] sm:$0xff] %v835
        %868 = vst [vmem:[#allocation2 + $0x8] sm:$0xff] %v836
        %869 = vst [vmem:[#allocation2 + $0x10] sm:$0xff] %v837
        %870 = vst [vmem:[#allocation2 + $0x18] sm:$0xff] %v838
        %871 = vst [vmem:[#allocation2 + $0x20] sm:$0xff] %v839
        %872 = vst [vmem:[#allocation2 + $0x28] sm:$0xff] %v840
        %873 = vst [vmem:[#allocation2 + $0x30] sm:$0xff] %v841
        %874 = vst [vmem:[#allocation2 + $0x38] sm:$0xff] %v842
        %875 = vst [vmem:[#allocation2 + $0x40] sm:$0xff] %v843
        %876 = vst [vmem:[#allocation2 + $0x48] sm:$0xff] %v844
        %877 = vst [vmem:[#allocation2 + $0x50] sm:$0xff] %v845
        %878 = vst [vmem:[#allocation2 + $0x58] sm:$0xff] %v846
        %879 = vst [vmem:[#allocation2 + $0x60] sm:$0xff] %v847
        %880 = vst [vmem:[#allocation2 + $0x68] sm:$0xff] %v848
        %881 = vst [vmem:[#allocation2 + $0x70] sm:$0xff] %v849
        %882 = vst [vmem:[#allocation2 + $0x78] sm:$0xff] %v850
        %883 = vst [vmem:[#allocation2 + $0x80] sm:$0xff] %v851
        %884 = vst [vmem:[#allocation2 + $0x88] sm:$0xff] %v852
        %885 = vst [vmem:[#allocation2 + $0x90] sm:$0xff] %v853
        %886 = vst [vmem:[#allocation2 + $0x98] sm:$0xff] %v854
        %887 = vst [vmem:[#allocation2 + $0xa0] sm:$0xff] %v855
        %888 = vst [vmem:[#allocation2 + $0xa8] sm:$0xff] %v856
        %889 = vst [vmem:[#allocation2 + $0xb0] sm:$0xff] %v857
        %890 = vst [vmem:[#allocation2 + $0xb8] sm:$0xff] %v858
        %891 = vst [vmem:[#allocation2 + $0xc0] sm:$0xff] %v859
        %892 = vst [vmem:[#allocation2 + $0xc8] sm:$0xff] %v860
        %893 = vst [vmem:[#allocation2 + $0xd0] sm:$0xff] %v861
        %894 = vst [vmem:[#allocation2 + $0xd8] sm:$0xff] %v862
        %895 = vst [vmem:[#allocation2 + $0xe0] sm:$0xff] %v863
        %896 = vst [vmem:[#allocation2 + $0xe8] sm:$0xff] %v864
        %897 = vst [vmem:[#allocation2 + $0xf0] sm:$0xff] %v865
        %898 = vst [vmem:[#allocation2 + $0xf8] sm:$0xff] %v866
        // Predicated region
        $region45: #{tpu_custom_call.1} parent=27 // pred_check
          %p899 = pneg %p279
        $region46: #{tpu_custom_call.1} parent=27 // pred_check_branch
          %901 = sbr.rel (%p899) target = $region48
        $region47: #{tpu_custom_call.1} parent=27 // pred_region
          %v902 = vld [vmem:[#allocation2] sm:$0xff]
          %v903 = vld [vmem:[#allocation2 + $0x8] sm:$0xff]
          %v904 = vld [vmem:[#allocation2 + $0x10] sm:$0xff]
          %v905 = vld [vmem:[#allocation2 + $0x18] sm:$0xff]
          %v906 = vld [vmem:[#allocation2 + $0x20] sm:$0xff]
          %v907 = vld [vmem:[#allocation2 + $0x28] sm:$0xff]
          %v908 = vld [vmem:[#allocation2 + $0x30] sm:$0xff]
          %v909 = vld [vmem:[#allocation2 + $0x38] sm:$0xff]
          %v910 = vld [vmem:[#allocation2 + $0x40] sm:$0xff]
          %v911 = vld [vmem:[#allocation2 + $0x48] sm:$0xff]
          %v912 = vld [vmem:[#allocation2 + $0x50] sm:$0xff]
          %v913 = vld [vmem:[#allocation2 + $0x58] sm:$0xff]
          %v914 = vld [vmem:[#allocation2 + $0x60] sm:$0xff]
          %v915 = vld [vmem:[#allocation2 + $0x68] sm:$0xff]
          %v916 = vld [vmem:[#allocation2 + $0x70] sm:$0xff]
          %v917 = vld [vmem:[#allocation2 + $0x78] sm:$0xff]
          %v918 = vld [vmem:[#allocation2 + $0x80] sm:$0xff]
          %v919 = vld [vmem:[#allocation2 + $0x88] sm:$0xff]
          %v920 = vld [vmem:[#allocation2 + $0x90] sm:$0xff]
          %v921 = vld [vmem:[#allocation2 + $0x98] sm:$0xff]
          %v922 = vld [vmem:[#allocation2 + $0xa0] sm:$0xff]
          %v923 = vld [vmem:[#allocation2 + $0xa8] sm:$0xff]
          %v924 = vld [vmem:[#allocation2 + $0xb0] sm:$0xff]
          %v925 = vld [vmem:[#allocation2 + $0xb8] sm:$0xff]
          %v926 = vld [vmem:[#allocation2 + $0xc0] sm:$0xff]
          %v927 = vld [vmem:[#allocation2 + $0xc8] sm:$0xff]
          %v928 = vld [vmem:[#allocation2 + $0xd0] sm:$0xff]
          %v929 = vld [vmem:[#allocation2 + $0xd8] sm:$0xff]
          %v930 = vld [vmem:[#allocation2 + $0xe0] sm:$0xff]
          %v931 = vld [vmem:[#allocation2 + $0xe8] sm:$0xff]
          %v932 = vld [vmem:[#allocation2 + $0xf0] sm:$0xff]
          %v933 = vld [vmem:[#allocation2 + $0xf8] sm:$0xff]
          %v934 = vpack.c.bf16 %v903, %v902
          %v935 = vpack.c.bf16 %v905, %v904
          %v936 = vpack.c.bf16 %v907, %v906
          %v937 = vpack.c.bf16 %v909, %v908
          %v938 = vpack.c.bf16 %v911, %v910
          %v939 = vpack.c.bf16 %v913, %v912
          %v940 = vpack.c.bf16 %v915, %v914
          %v941 = vpack.c.bf16 %v917, %v916
          %v942 = vpack.c.bf16 %v919, %v918
          %v943 = vpack.c.bf16 %v921, %v920
          %v944 = vpack.c.bf16 %v923, %v922
          %v945 = vpack.c.bf16 %v925, %v924
          %v946 = vpack.c.bf16 %v927, %v926
          %v947 = vpack.c.bf16 %v929, %v928
          %v948 = vpack.c.bf16 %v931, %v930
          %v949 = vpack.c.bf16 %v933, %v932
          %v966 = vunpack.c.l.b16 %v934
          %v967 = vunpack.c.h.b16 %v934
          %v968 = vunpack.c.l.b16 %v935
          %v969 = vunpack.c.h.b16 %v935
          %v970 = vunpack.c.l.b16 %v936
          %v971 = vunpack.c.h.b16 %v936
          %v972 = vunpack.c.l.b16 %v937
          %v973 = vunpack.c.h.b16 %v937
          %v974 = vunpack.c.l.b16 %v938
          %v975 = vunpack.c.h.b16 %v938
          %v976 = vunpack.c.l.b16 %v939
          %v977 = vunpack.c.h.b16 %v939
          %v978 = vunpack.c.l.b16 %v940
          %v979 = vunpack.c.h.b16 %v940
          %v980 = vunpack.c.l.b16 %v941
          %v981 = vunpack.c.h.b16 %v941
          %v982 = vunpack.c.l.b16 %v942
          %v983 = vunpack.c.h.b16 %v942
          %v984 = vunpack.c.l.b16 %v943
          %v985 = vunpack.c.h.b16 %v943
          %v986 = vunpack.c.l.b16 %v944
          %v987 = vunpack.c.h.b16 %v944
          %v988 = vunpack.c.l.b16 %v945
          %v989 = vunpack.c.h.b16 %v945
          %v990 = vunpack.c.l.b16 %v946
          %v991 = vunpack.c.h.b16 %v946
          %v992 = vunpack.c.l.b16 %v947
          %v993 = vunpack.c.h.b16 %v947
          %v994 = vunpack.c.l.b16 %v948
          %v995 = vunpack.c.h.b16 %v948
          %v996 = vunpack.c.l.b16 %v949
          %v997 = vunpack.c.h.b16 %v949
          %v998 = vpack.c.b16 %v966, %v966
          %v999 = vpack.c.b16 %v967, %v967
          %v1000 = vpack.c.b16 %v968, %v968
          %v1001 = vpack.c.b16 %v969, %v969
          %v1002 = vpack.c.b16 %v970, %v970
          %v1003 = vpack.c.b16 %v971, %v971
          %v1004 = vpack.c.b16 %v972, %v972
          %v1005 = vpack.c.b16 %v973, %v973
          %v1006 = vpack.c.b16 %v974, %v974
          %v1007 = vpack.c.b16 %v975, %v975
          %v1008 = vpack.c.b16 %v976, %v976
          %v1009 = vpack.c.b16 %v977, %v977
          %v1010 = vpack.c.b16 %v978, %v978
          %v1011 = vpack.c.b16 %v979, %v979
          %v1012 = vpack.c.b16 %v980, %v980
          %v1013 = vpack.c.b16 %v981, %v981
          %v1014 = vpack.c.b16 %v982, %v982
          %v1015 = vpack.c.b16 %v983, %v983
          %v1016 = vpack.c.b16 %v984, %v984
          %v1017 = vpack.c.b16 %v985, %v985
          %v1018 = vpack.c.b16 %v986, %v986
          %v1019 = vpack.c.b16 %v987, %v987
          %v1020 = vpack.c.b16 %v988, %v988
          %v1021 = vpack.c.b16 %v989, %v989
          %v1022 = vpack.c.b16 %v990, %v990
          %v1023 = vpack.c.b16 %v991, %v991
          %v1024 = vpack.c.b16 %v992, %v992
          %v1025 = vpack.c.b16 %v993, %v993
          %v1026 = vpack.c.b16 %v994, %v994
          %v1027 = vpack.c.b16 %v995, %v995
          %v1028 = vpack.c.b16 %v996, %v996
          %v1029 = vpack.c.b16 %v997, %v997
          %1062 = vst [vmem:[%s269] sm:$0xf] %v998
          %1063 = vst [vmem:[%s269 + $0x4] sm:$0xf] %v999
          %1064 = vst [vmem:[%s269 + $0x8] sm:$0xf] %v1000
          %1065 = vst [vmem:[%s269 + $0xc] sm:$0xf] %v1001
          %1066 = vst [vmem:[%s269 + $0x10] sm:$0xf] %v1002
          %1067 = vst [vmem:[%s269 + $0x14] sm:$0xf] %v1003
          %1068 = vst [vmem:[%s269 + $0x18] sm:$0xf] %v1004
          %1069 = vst [vmem:[%s269 + $0x1c] sm:$0xf] %v1005
          %1070 = vst [vmem:[%s269 + $0x20] sm:$0xf] %v1006
          %1071 = vst [vmem:[%s269 + $0x24] sm:$0xf] %v1007
          %1072 = vst [vmem:[%s269 + $0x28] sm:$0xf] %v1008
          %1073 = vst [vmem:[%s269 + $0x2c] sm:$0xf] %v1009
          %1074 = vst [vmem:[%s269 + $0x30] sm:$0xf] %v1010
          %1075 = vst [vmem:[%s269 + $0x34] sm:$0xf] %v1011
          %1076 = vst [vmem:[%s269 + $0x38] sm:$0xf] %v1012
          %1077 = vst [vmem:[%s269 + $0x3c] sm:$0xf] %v1013
          %1078 = vst [vmem:[%s269 + $0x40] sm:$0xf] %v1014
          %1079 = vst [vmem:[%s269 + $0x44] sm:$0xf] %v1015
          %1080 = vst [vmem:[%s269 + $0x48] sm:$0xf] %v1016
          %1081 = vst [vmem:[%s269 + $0x4c] sm:$0xf] %v1017
          %1082 = vst [vmem:[%s269 + $0x50] sm:$0xf] %v1018
          %1083 = vst [vmem:[%s269 + $0x54] sm:$0xf] %v1019
          %1084 = vst [vmem:[%s269 + $0x58] sm:$0xf] %v1020
          %1085 = vst [vmem:[%s269 + $0x5c] sm:$0xf] %v1021
          %1086 = vst [vmem:[%s269 + $0x60] sm:$0xf] %v1022
          %1087 = vst [vmem:[%s269 + $0x64] sm:$0xf] %v1023
          %1088 = vst [vmem:[%s269 + $0x68] sm:$0xf] %v1024
          %1089 = vst [vmem:[%s269 + $0x6c] sm:$0xf] %v1025
          %1090 = vst [vmem:[%s269 + $0x70] sm:$0xf] %v1026
          %1091 = vst [vmem:[%s269 + $0x74] sm:$0xf] %v1027
          %1092 = vst [vmem:[%s269 + $0x78] sm:$0xf] %v1028
          %1093 = vst [vmem:[%s269 + $0x7c] sm:$0xf] %v1029
          %v1094 = vld [vmem:[#allocation9] sm:$0x1]
          %v1095 = vadd.f32 %v902, %v903
          %v1096 = vadd.f32 %v1095, %v904
          %v1097 = vadd.f32 %v1096, %v905
          %v1098 = vadd.f32 %v1097, %v906
          %v1099 = vadd.f32 %v1098, %v907
          %v1100 = vadd.f32 %v1099, %v908
          %v1101 = vadd.f32 %v1100, %v909
          %v1102 = vadd.f32 %v1101, %v910
          %v1103 = vadd.f32 %v1102, %v911
          %v1104 = vadd.f32 %v1103, %v912
          %v1105 = vadd.f32 %v1104, %v913
          %v1106 = vadd.f32 %v1105, %v914
          %v1107 = vadd.f32 %v1106, %v915
          %v1108 = vadd.f32 %v1107, %v916
          %v1109 = vadd.f32 %v1108, %v917
          %v1110 = vadd.f32 %v1109, %v918
          %v1111 = vadd.f32 %v1110, %v919
          %v1112 = vadd.f32 %v1111, %v920
          %v1113 = vadd.f32 %v1112, %v921
          %v1114 = vadd.f32 %v1113, %v922
          %v1115 = vadd.f32 %v1114, %v923
          %v1116 = vadd.f32 %v1115, %v924
          %v1117 = vadd.f32 %v1116, %v925
          %v1118 = vadd.f32 %v1117, %v926
          %v1119 = vadd.f32 %v1118, %v927
          %v1120 = vadd.f32 %v1119, %v928
          %v1121 = vadd.f32 %v1120, %v929
          %v1122 = vadd.f32 %v1121, %v930
          %v1123 = vadd.f32 %v1122, %v931
          %v1124 = vadd.f32 %v1123, %v932
          %v1125 = vadd.f32 %v1124, %v933
          %v1126 = vrot.slane %v1125, 4
          %v1127 = vadd.f32 %v1125, %v1126
          %v1128 = vrot.slane %v1127, 2
          %v1129 = vadd.f32 %v1127, %v1128
          %v1130 = vrot.slane %v1129, 1
          %v1131 = vadd.f32 %v1129, %v1130
          %v1132 = vadd.f32 %v1094, %v1131
          %1133 = vst [vmem:[#allocation9] sm:$0x1] %v1132
          %v1134 = vld [vmem:[#allocation11] sm:$0x1]
          %v1135 = vmul.f32 %v902, %v902
          %v1136 = vmul.f32 %v903, %v903
          %v1137 = vmul.f32 %v904, %v904
          %v1138 = vmul.f32 %v905, %v905
          %v1139 = vmul.f32 %v906, %v906
          %v1140 = vmul.f32 %v907, %v907
          %v1141 = vmul.f32 %v908, %v908
          %v1142 = vmul.f32 %v909, %v909
          %v1143 = vmul.f32 %v910, %v910
          %v1144 = vmul.f32 %v911, %v911
          %v1145 = vmul.f32 %v912, %v912
          %v1146 = vmul.f32 %v913, %v913
          %v1147 = vmul.f32 %v914, %v914
          %v1148 = vmul.f32 %v915, %v915
          %v1149 = vmul.f32 %v916, %v916
          %v1150 = vmul.f32 %v917, %v917
          %v1151 = vmul.f32 %v918, %v918
          %v1152 = vmul.f32 %v919, %v919
          %v1153 = vmul.f32 %v920, %v920
          %v1154 = vmul.f32 %v921, %v921
          %v1155 = vmul.f32 %v922, %v922
          %v1156 = vmul.f32 %v923, %v923
          %v1157 = vmul.f32 %v924, %v924
          %v1158 = vmul.f32 %v925, %v925
          %v1159 = vmul.f32 %v926, %v926
          %v1160 = vmul.f32 %v927, %v927
          %v1161 = vmul.f32 %v928, %v928
          %v1162 = vmul.f32 %v929, %v929
          %v1163 = vmul.f32 %v930, %v930
          %v1164 = vmul.f32 %v931, %v931
          %v1165 = vmul.f32 %v932, %v932
          %v1166 = vmul.f32 %v933, %v933
          %v1167 = vadd.f32 %v1135, %v1136
          %v1168 = vadd.f32 %v1167, %v1137
          %v1169 = vadd.f32 %v1168, %v1138
          %v1170 = vadd.f32 %v1169, %v1139
          %v1171 = vadd.f32 %v1170, %v1140
          %v1172 = vadd.f32 %v1171, %v1141
          %v1173 = vadd.f32 %v1172, %v1142
          %v1174 = vadd.f32 %v1173, %v1143
          %v1175 = vadd.f32 %v1174, %v1144
          %v1176 = vadd.f32 %v1175, %v1145
          %v1177 = vadd.f32 %v1176, %v1146
          %v1178 = vadd.f32 %v1177, %v1147
          %v1179 = vadd.f32 %v1178, %v1148
          %v1180 = vadd.f32 %v1179, %v1149
          %v1181 = vadd.f32 %v1180, %v1150
          %v1182 = vadd.f32 %v1181, %v1151
          %v1183 = vadd.f32 %v1182, %v1152
          %v1184 = vadd.f32 %v1183, %v1153
          %v1185 = vadd.f32 %v1184, %v1154
          %v1186 = vadd.f32 %v1185, %v1155
          %v1187 = vadd.f32 %v1186, %v1156
          %v1188 = vadd.f32 %v1187, %v1157
          %v1189 = vadd.f32 %v1188, %v1158
          %v1190 = vadd.f32 %v1189, %v1159
          %v1191 = vadd.f32 %v1190, %v1160
          %v1192 = vadd.f32 %v1191, %v1161
          %v1193 = vadd.f32 %v1192, %v1162
          %v1194 = vadd.f32 %v1193, %v1163
          %v1195 = vadd.f32 %v1194, %v1164
          %v1196 = vadd.f32 %v1195, %v1165
          %v1197 = vadd.f32 %v1196, %v1166
          %v1198 = vrot.slane %v1197, 4
          %v1199 = vadd.f32 %v1197, %v1198
          %v1200 = vrot.slane %v1199, 2
          %v1201 = vadd.f32 %v1199, %v1200
          %v1202 = vrot.slane %v1201, 1
          %v1203 = vadd.f32 %v1201, %v1202
          %v1204 = vadd.f32 %v1134, %v1203
          %1205 = vst [vmem:[#allocation11] sm:$0x1] %v1204
        $region48: #{tpu_custom_call.1} parent=27 // pred_fallthru
          _
        %s1206 = sand.u32 %s109, 1
        %s1207 = scalar_lea.sflag [#allocation5], %s1206
        %s1208 = sand.u32 %s109, 1
        %s1209 = smul.addr %s1208, 128
        %s1210 = scalar_lea.vmem [#allocation8], %s1209
        // Predicated region
        $region49: #{tpu_custom_call.1} parent=27 // pred_check
          %p1211 = pneg %p119
        $region50: #{tpu_custom_call.1} parent=27 // pred_check_branch
          %1213 = sbr.rel (%p1211) target = $region52
        $region51: #{tpu_custom_call.1} parent=27 // pred_region
          %s1214 = smul.u32 32, %s30
          %s1216 = ssub.s32 2048, 2048
          %1217 = vsyncadd %s1207, %s1216
          %s1218 = sadd.s32 %s29, %s1214
          %s1219 = smul.addr %s1218, 64
          %s1220 = scalar_lea.hbm %s2, %s1219
          %s1221 = sshll.u32 %s1210, 4
          %s1222 = int_to_ptr.vmem [resolvable:$true] %s1221
          %1227 = dma.vmem_to_hbm [thread:$0]  %s1222, 2048, %s1220, %s1207, 64, 64, 4
        $region52: #{tpu_custom_call.1} parent=27 // pred_fallthru
          _
        // Predicated region
        $region53: #{tpu_custom_call.1} parent=27 // pred_check
          %p1228 = pneg %p145
        $region54: #{tpu_custom_call.1} parent=27 // pred_check_branch
          %1230 = sbr.rel (%p1228) target = $region56
        $region55: #{tpu_custom_call.1} parent=27 // pred_region
          %s1232 = ssub.s32 16, 16
          %1233 = vsyncadd [#allocation10], %s1232
          %s1234 = smul.addr %s29, 16
          %s1235 = scalar_lea.hbm %s3, %s1234
          %s1237 = sshll.u32 [#allocation9], 4
          %s1238 = int_to_ptr.vmem [resolvable:$true] %s1237
          %1240 = dma.vmem_to_hbm [thread:$0]  %s1238, 16, %s1235, [#allocation10]
        $region56: #{tpu_custom_call.1} parent=27 // pred_fallthru
          _
        // Predicated region
        $region57: #{tpu_custom_call.1} parent=27 // pred_check
          %p1241 = pneg %p171
        $region58: #{tpu_custom_call.1} parent=27 // pred_check_branch
          %1243 = sbr.rel (%p1241) target = $region60
        $region59: #{tpu_custom_call.1} parent=27 // pred_region
          %s1245 = ssub.s32 16, 16
          %1246 = vsyncadd [#allocation10], %s1245
          %s1247 = smul.addr %s29, 16
          %s1248 = scalar_lea.hbm %s4, %s1247
          %s1250 = sshll.u32 [#allocation11], 4
          %s1251 = int_to_ptr.vmem [resolvable:$true] %s1250
          %1253 = dma.vmem_to_hbm [thread:$0]  %s1251, 16, %s1248, [#allocation10]
        $region60: #{tpu_custom_call.1} parent=27 // pred_fallthru
          _
        // Predicated region
        $region61: #{tpu_custom_call.1} parent=27 // pred_check
          %p1254 = pneg %p145
        $region62: #{tpu_custom_call.1} parent=27 // pred_check_branch
          %1256 = sbr.rel (%p1254) target = $region64
        $region63: #{tpu_custom_call.1} parent=27 // pred_region
          %1257 = dma.done [#allocation10], 16
        $region64: #{tpu_custom_call.1} parent=27 // pred_fallthru
          _
        // Predicated region
        $region65: #{tpu_custom_call.1} parent=27 // pred_check
          %p1258 = pneg %p171
        $region66: #{tpu_custom_call.1} parent=27 // pred_check_branch
          %1260 = sbr.rel (%p1258) target = $region68
        $region67: #{tpu_custom_call.1} parent=27 // pred_region
          %1261 = dma.done [#allocation10], 16
        $region68: #{tpu_custom_call.1} parent=27 // pred_fallthru
          _
      $region28: #{tpu_custom_call.1} parent=5 // pred_fallthru
        _
      %p1262 = scmp.le.s32.totalorder 2, %s19
      // Predicated region
      $region69: #{tpu_custom_call.1} parent=5 // pred_check
        %p1263 = pneg %p1262
      $region70: #{tpu_custom_call.1} parent=5 // pred_check_branch
        %1265 = sbr.rel (%p1263) target = $region72
      $region71: #{tpu_custom_call.1} parent=5 // pred_region
        %s1266 = ssub.s32 %s19, 2
        // Predicated region
        $region73: #{tpu_custom_call.1} parent=71 // pred_check
          %p1267 = pneg %p125
        $region74: #{tpu_custom_call.1} parent=71 // pred_check_branch
          %1269 = sbr.rel (%p1267) target = $region76
        $region75: #{tpu_custom_call.1} parent=71 // pred_region
          %s1270 = sand.u32 %s110, 1
          %s1271 = scalar_lea.sflag [#allocation5], %s1270
          %s1272 = sand.u32 %s110, 1
          %s1273 = smul.addr %s1272, 128
          %s1274 = scalar_lea.vmem [#allocation8], %s1273
          %1275 = dma.done %s1271, 2048
        $region76: #{tpu_custom_call.1} parent=71 // pred_fallthru
          _
      $region72: #{tpu_custom_call.1} parent=5 // pred_fallthru
        _
    $region6: #{tpu_custom_call.1} parent=1 // loop_footer
      %s23 = sadd.s32 1, %s19
    $region7: #{tpu_custom_call.1} parent=1 // loop_footer_branch
      %18 = sbr.rel target = $region3
    $region8: #{tpu_custom_call.1} parent=1 // loop_exit
      _
    %1276 = vsyncpa [#allocation4], 1
    %s1277 = scalar_lea.sflag [#allocation4], 1
    %1278 = vsyncpa %s1277, 1
    %1279 = vsyncpa [#allocation7], 1
    %1280 = vsyncpa [#allocation5], 1
    %s1281 = scalar_lea.sflag [#allocation5], 1
    %1282 = vsyncpa %s1281, 1
    %1283 = vsyncpa [#allocation10], 1

</llo_original>
